<compile_context>
chip_gen: v7x
topology: tpu7x:2x2x1
jax: 0.10.0
libtpu: 0.0.40
codegen_flags: <defaults>
</compile_context>

<pallas_src>
import jax
import jax.numpy as jnp
import numpy as np
from jax.experimental import pallas as pl
from jax.experimental.pallas import tpu as pltpu


# ----------------------------- fused Pallas kernel ------------------------------

def _ista_fused_kernel(sc_ref, x0_ref, ptp_ref, ptb_ref,
                       w1f_ref, w2f_ref, w1b_ref, w2b_ref,
                       x_ref, sym_ref):
    layer = pl.program_id(1)
    lam = sc_ref[layer, 0]          # lambda_step
    thr = sc_ref[layer, 1]          # soft_thr

    # Initialize the resident x accumulator from the Qinit projection.
    @pl.when(layer == 0)
    def _():
        x_ref[...] = x0_ref[...]

    n = x_ref.shape[-1]
    c = w1f_ref.shape[1]            # hidden channels (32)

    # Carried state (f32): x <- x - lam * x @ PhiTPhi + lam * PhiTb
    x = x_ref[0]                    # (1, N)
    x = x - lam * jnp.dot(x, ptp_ref[...], preferred_element_type=jnp.float32)
    x = x + lam * ptb_ref[0]

    # Boundary masks for 'same' (padding=1) convolution after lane rolls.
    lane1 = jax.lax.broadcasted_iota(jnp.int32, (1, n), 1)
    lane_c = jax.lax.broadcasted_iota(jnp.int32, (c, n), 1)
    first1, last1 = lane1 == 0, lane1 == n - 1
    first_c, last_c = lane_c == 0, lane_c == n - 1

    def taps(h, m_first, m_last):
        # h_prev[n] = h[n-1] (zero at n=0), h_next[n] = h[n+1] (zero at n=N-1)
        h_prev = jnp.where(m_first, 0.0, pltpu.roll(h, 1, 1))
        h_next = jnp.where(m_last, 0.0, pltpu.roll(h, n - 1, 1))
        return h_prev, h_next

    def conv_in1(h, w):             # h: (1, N) f32, w: (C, 3) f32 -> (C, N) f32
        hp, hn = taps(h, first1, last1)
        return w[:, 0:1] * hp + w[:, 1:2] * h + w[:, 2:3] * hn

    def conv_im2col(h, w):          # h: (C, N) f32, w: (Cout, 3C) bf16 -> (Cout, N) f32
        hp, hn = taps(h, first_c, last_c)
        col = jnp.concatenate([hp, h, hn], axis=0).astype(jnp.bfloat16)
        return jnp.dot(w, col, preferred_element_type=jnp.float32)

    w1f = w1f_ref[0]                # (C, 3)   f32
    w2f = w2f_ref[0]                # (C, 3C)  bf16
    w1b = w1b_ref[0]                # (C, 3C)  bf16
    w2b = w2b_ref[0]                # (1, 3C)  bf16

    x_input = x                                           # (1, N)
    h = jnp.maximum(conv_in1(x_input, w1f), 0.0)          # (C, N)
    x_forward = conv_im2col(h, w2f)                       # (C, N)
    st = x_forward - jnp.clip(x_forward, -thr, thr)       # soft threshold
    h = jnp.maximum(conv_im2col(st, w1b), 0.0)
    x_backward = conv_im2col(h, w2b)                      # (1, N)
    h = jnp.maximum(conv_im2col(x_forward, w1b), 0.0)
    x_est = conv_im2col(h, w2b)                           # (1, N)

    x_ref[0] = x_backward
    sym_ref[...] = (x_est - x_input)[None, None]


def _fused_ista_call(sc_all, x0, phitphi, phitb, w1f_p, w2f_p, w1b_p, w2b_p):
    L = sc_all.shape[0]
    B, _, N = x0.shape
    C = w1f_p.shape[1]

    return pl.pallas_call(
        _ista_fused_kernel,
        out_shape=(jax.ShapeDtypeStruct((B, 1, N), jnp.float32),        # x_final
                   jax.ShapeDtypeStruct((L, B, 1, N), jnp.float32)),    # sym per layer
        grid=(B, L),
        in_specs=[
            pl.BlockSpec(memory_space=pltpu.MemorySpace.SMEM),          # (L, 2) scalars
            pl.BlockSpec((1, 1, N), lambda b, l: (b, 0, 0)),            # x0
            pl.BlockSpec((N, N), lambda b, l: (0, 0)),                  # PhiTPhi (resident)
            pl.BlockSpec((1, 1, N), lambda b, l: (b, 0, 0)),            # PhiTb
            pl.BlockSpec((1, C, 3), lambda b, l: (l, 0, 0)),            # conv1_forward
            pl.BlockSpec((1, C, 3 * C), lambda b, l: (l, 0, 0)),        # conv2_forward
            pl.BlockSpec((1, C, 3 * C), lambda b, l: (l, 0, 0)),        # conv1_backward
            pl.BlockSpec((1, 1, 3 * C), lambda b, l: (l, 0, 0)),        # conv2_backward
        ],
        out_specs=(
            pl.BlockSpec((1, 1, N), lambda b, l: (b, 0, 0)),            # x accumulator
            pl.BlockSpec((1, 1, 1, N), lambda b, l: (l, b, 0, 0)),      # sym
        ),
        compiler_params=pltpu.CompilerParams(
            dimension_semantics=("parallel", "arbitrary")),
    )(sc_all, x0, phitphi, phitb, w1f_p, w2f_p, w1b_p, w2b_p)


# ----------------------------- parameters / packing ------------------------------

def xavier_normal(key, shape):
    cout, cin, k = shape
    std = float(np.sqrt(2.0 / (cin * k + cout * k)))
    return std * jax.random.normal(key, shape, dtype=jnp.float32)


def init_ista_params(key, layer_no):
    params = []
    for i in range(layer_no):
        keys = jax.random.split(jax.random.fold_in(key, i), 4)
        params.append(dict(
            sc=jnp.array([0.5, 0.01], dtype=jnp.float32),       # [lambda_step, soft_thr]
            w1f=xavier_normal(keys[0], (32, 1, 3)),
            w2f=xavier_normal(keys[1], (32, 32, 3)),
            w1b=xavier_normal(keys[2], (32, 32, 3)),
            w2b=xavier_normal(keys[3], (1, 32, 3)),
        ))
    return params


def pack_ista_params(params):
    """One-time repack: (Cout, Cin, K) -> im2col (Cout, K*Cin), stacked over layers."""
    def pack(w):
        cout, cin, k = w.shape
        return jnp.transpose(w, (0, 2, 1)).reshape(cout, k * cin)
    sc_all = jnp.stack([p['sc'] for p in params]).astype(jnp.float32)            # (L, 2)
    w1f_p = jnp.stack([pack(p['w1f']) for p in params]).astype(jnp.float32)      # (L, 32, 3)
    w2f_p = jnp.stack([pack(p['w2f']) for p in params]).astype(jnp.bfloat16)     # (L, 32, 96)
    w1b_p = jnp.stack([pack(p['w1b']) for p in params]).astype(jnp.bfloat16)     # (L, 32, 96)
    w2b_p = jnp.stack([pack(p['w2b']) for p in params]).astype(jnp.bfloat16)     # (L, 1, 96)
    return sc_all, w1f_p, w2f_p, w1b_p, w2b_p


@jax.jit
def ista_net1d_forward(phix, phi, qinit, packed):
    # Phix: (B, M), Phi: (M, N), Qinit: (N, M) -- same conventions as the PyTorch module.
    sc_all, w1f_p, w2f_p, w1b_p, w2b_p = packed
    L = sc_all.shape[0]
    B = phix.shape[0]
    N = phi.shape[1]

    # One-time setup (plain XLA; tiny matmuls not worth extra pallas_calls).
    phitphi = jnp.dot(phi.T, phi, preferred_element_type=jnp.float32)   # (N, N)
    phitb = jnp.dot(phix, phi, preferred_element_type=jnp.float32)      # (B, N)
    x0 = jnp.dot(phix, qinit.T, preferred_element_type=jnp.float32)     # (B, N)

    x_out, sym_out = _fused_ista_call(
        sc_all, x0.reshape(B, 1, N), phitphi, phitb.reshape(B, 1, N),
        w1f_p, w2f_p, w1b_p, w2b_p)

    x_final = x_out.reshape(B, N)
    sym_list = [sym_out[l] for l in range(L)]      # each (B, 1, N), like torch symloss
    return x_final, sym_list


# ----------------------------- pure-JAX reference ------------------------------

def _conv1d_ref(x, w):
    return jax.lax.conv_general_dilated(
        x, w, window_strides=(1,), padding=((1, 1),),
        dimension_numbers=('NCH', 'OIH', 'NCH'))


def ista_net1d_reference(phix, phi, qinit, params):
    phitphi = phi.T @ phi
    phitb = phix @ phi
    x = phix @ qinit.T
    syms = []
    for p in params:
        lam, thr = p['sc'][0], p['sc'][1]
        x = x - lam * (x @ phitphi)
        x = x + lam * phitb
        x_input = x[:, None, :]
        h = jax.nn.relu(_conv1d_ref(x_input, p['w1f']))
        x_fwd = _conv1d_ref(h, p['w2f'])
        st = jnp.sign(x_fwd) * jax.nn.relu(jnp.abs(x_fwd) - thr)
        h = jax.nn.relu(_conv1d_ref(st, p['w1b']))
        x_bwd = _conv1d_ref(h, p['w2b'])
        x = x_bwd[:, 0, :]
        h = jax.nn.relu(_conv1d_ref(x_fwd, p['w1b']))
        x_est = _conv1d_ref(h, p['w2b'])
        syms.append(x_est - x_input)
    return x, syms


# ----------------------------- main ------------------------------

if __name__ == "__main__":
    B, M, N, LAYERS = 2, 32, 128, 3
    key = jax.random.PRNGKey(0)
    k1, k2, k3, kp = jax.random.split(key, 4)
    phix = jax.random.normal(k1, (B, M), dtype=jnp.float32)
    phi = jax.random.normal(k2, (M, N), dtype=jnp.float32) / jnp.sqrt(float(M))
    qinit = jax.random.normal(k3, (N, M), dtype=jnp.float32) / jnp.sqrt(float(N))
    params = init_ista_params(kp, LAYERS)
    packed = pack_ista_params(params)   # one-time layout repack + bf16 weight cast

    x_final, sym_list = ista_net1d_forward(phix, phi, qinit, packed)
    x_final = jax.block_until_ready(x_final)
    sym_list = [jax.block_until_ready(s) for s in sym_list]

    x_ref, sym_ref = ista_net1d_reference(phix, phi, qinit, params)
    np.testing.assert_allclose(np.asarray(x_final), np.asarray(x_ref), rtol=2e-2, atol=2e-2)
    for s, sr in zip(sym_list, sym_ref):
        np.testing.assert_allclose(np.asarray(s), np.asarray(sr), rtol=2e-2, atol=2e-2)

    print("KERNEL_OK")
</pallas_src>

<mosaic_0001>
module attributes {stable_mosaic.version = 11 : i64} {
  func.func @_ista_fused_kernel(%arg0: i32, %arg1: i32, %arg2: memref<3x2xf32, #tpu.memory_space<smem>>, %arg3: memref<1x1x128xf32, #tpu.memory_space<vmem>>, %arg4: memref<128x128xf32, #tpu.memory_space<vmem>>, %arg5: memref<1x1x128xf32, #tpu.memory_space<vmem>>, %arg6: memref<1x32x3xf32, #tpu.memory_space<vmem>>, %arg7: memref<1x32x96xbf16, #tpu.memory_space<vmem>>, %arg8: memref<1x32x96xbf16, #tpu.memory_space<vmem>>, %arg9: memref<1x1x96xbf16, #tpu.memory_space<vmem>>, %arg10: memref<1x1x128xf32, #tpu.memory_space<vmem>>, %arg11: memref<1x1x1x128xf32, #tpu.memory_space<vmem>>) attributes {dimension_semantics = [#tpu.dimension_semantics<parallel>, #tpu.dimension_semantics<arbitrary>], iteration_bounds = array<i64: 2, 3>, scalar_prefetch = 0 : i64, scratch_operands = 0 : i64, tpu.core_type = #tpu.core_type<tc>, window_params = [{transform_indices = @transform_0, window_bounds = array<i64: 3, 2>}, {transform_indices = @transform_1, window_bounds = array<i64: 1, 1, 128>}, {pipeline_mode = #tpu.pipeline_mode<synchronous>, transform_indices = @transform_2, window_bounds = array<i64: 128, 128>}, {transform_indices = @transform_3, window_bounds = array<i64: 1, 1, 128>}, {transform_indices = @transform_4, window_bounds = array<i64: 1, 32, 3>}, {transform_indices = @transform_5, window_bounds = array<i64: 1, 32, 96>}, {transform_indices = @transform_6, window_bounds = array<i64: 1, 32, 96>}, {transform_indices = @transform_7, window_bounds = array<i64: 1, 1, 96>}, {transform_indices = @transform_8, window_bounds = array<i64: 1, 1, 128>}, {transform_indices = @transform_9, window_bounds = array<i64: 1, 1, 1, 128>}]} {
    %0 = arith.index_cast %arg1 : i32 to index
    %c0 = arith.constant 0 : index
    %1 = memref.load %arg2[%0, %c0] : memref<3x2xf32, #tpu.memory_space<smem>>
    %2 = arith.index_cast %arg1 : i32 to index
    %c1 = arith.constant 1 : index
    %3 = memref.load %arg2[%2, %c1] : memref<3x2xf32, #tpu.memory_space<smem>>
    %c0_i32 = arith.constant 0 : i32
    %4 = arith.cmpi eq, %arg1, %c0_i32 : i32
    %5 = arith.extui %4 : i1 to i32
    %c0_i32_0 = arith.constant 0 : i32
    %6 = arith.cmpi ne, %5, %c0_i32_0 : i32
    scf.if %6 {
      %c0_63 = arith.constant 0 : index
      %c0_64 = arith.constant 0 : index
      %c0_65 = arith.constant 0 : index
      %120 = vector.load %arg3[%c0_63, %c0_64, %c0_65] : memref<1x1x128xf32, #tpu.memory_space<vmem>>, vector<1x1x128xf32>
      %c0_66 = arith.constant 0 : index
      %c0_67 = arith.constant 0 : index
      %c0_68 = arith.constant 0 : index
      %121 = vector.load %arg10[%c0_66, %c0_67, %c0_68] : memref<1x1x128xf32, #tpu.memory_space<vmem>>, vector<1x1x128xf32>
      tpu.vector_store %arg10[%c0_66, %c0_67, %c0_68], %120 {strides = array<i32>} : memref<1x1x128xf32, #tpu.memory_space<vmem>>, vector<1x1x128xf32>,
    } else {
    }
    %c0_1 = arith.constant 0 : index
    %c0_2 = arith.constant 0 : index
    %c0_3 = arith.constant 0 : index
    %7 = vector.load %arg10[%c0_1, %c0_2, %c0_3] : memref<1x1x128xf32, #tpu.memory_space<vmem>>, vector<1x1x128xf32>
    %8 = vector.shape_cast %7 : vector<1x1x128xf32> to vector<1x128xf32>
    %c0_4 = arith.constant 0 : index
    %c0_5 = arith.constant 0 : index
    %9 = vector.load %arg4[%c0_4, %c0_5] : memref<128x128xf32, #tpu.memory_space<vmem>>, vector<128x128xf32>
    %cst = arith.constant dense<0.000000e+00> : vector<1x128xf32>
    %10 = tpu.matmul %8, %9, %cst {dimension_numbers = #tpu.dot_dimension_numbers<[1], [0], [0], [1], [0, 0, 1, 1], [], []>} : vector<1x128xf32>, vector<128x128xf32>, vector<1x128xf32> -> vector<1x128xf32>
    %11 = vector.broadcast %1 : f32 to vector<1x128xf32>
    %12 = arith.mulf %11, %10 : vector<1x128xf32>
    %13 = arith.subf %8, %12 : vector<1x128xf32>
    %c0_6 = arith.constant 0 : index
    %c0_7 = arith.constant 0 : index
    %c0_8 = arith.constant 0 : index
    %14 = vector.load %arg5[%c0_6, %c0_7, %c0_8] : memref<1x1x128xf32, #tpu.memory_space<vmem>>, vector<1x1x128xf32>
    %15 = vector.shape_cast %14 : vector<1x1x128xf32> to vector<1x128xf32>
    %16 = vector.broadcast %1 : f32 to vector<1x128xf32>
    %17 = arith.mulf %16, %15 : vector<1x128xf32>
    %18 = arith.addf %13, %17 : vector<1x128xf32>
    %19 = tpu.iota {dimensions = array<i32: 1>} : vector<1x128xi32>
    %20 = tpu.iota {dimensions = array<i32: 1>} : vector<32x128xi32>
    %c0_i32_9 = arith.constant 0 : i32
    %21 = vector.broadcast %c0_i32_9 : i32 to vector<1x128xi32>
    %22 = arith.cmpi eq, %19, %21 : vector<1x128xi32>
    %c127_i32 = arith.constant 127 : i32
    %23 = vector.broadcast %c127_i32 : i32 to vector<1x128xi32>
    %24 = arith.cmpi eq, %19, %23 : vector<1x128xi32>
    %c0_i32_10 = arith.constant 0 : i32
    %25 = vector.broadcast %c0_i32_10 : i32 to vector<32x128xi32>
    %26 = arith.cmpi eq, %20, %25 : vector<32x128xi32>
    %c127_i32_11 = arith.constant 127 : i32
    %27 = vector.broadcast %c127_i32_11 : i32 to vector<32x128xi32>
    %28 = arith.cmpi eq, %20, %27 : vector<32x128xi32>
    %c0_12 = arith.constant 0 : index
    %c0_13 = arith.constant 0 : index
    %c0_14 = arith.constant 0 : index
    %29 = vector.load %arg6[%c0_12, %c0_13, %c0_14] : memref<1x32x3xf32, #tpu.memory_space<vmem>>, vector<1x32x3xf32>
    %30 = vector.shape_cast %29 : vector<1x32x3xf32> to vector<32x3xf32>
    %c0_15 = arith.constant 0 : index
    %c0_16 = arith.constant 0 : index
    %c0_17 = arith.constant 0 : index
    %31 = vector.load %arg7[%c0_15, %c0_16, %c0_17] : memref<1x32x96xbf16, #tpu.memory_space<vmem>>, vector<1x32x96xbf16>
    %32 = vector.shape_cast %31 : vector<1x32x96xbf16> to vector<32x96xbf16>
    %c0_18 = arith.constant 0 : index
    %c0_19 = arith.constant 0 : index
    %c0_20 = arith.constant 0 : index
    %33 = vector.load %arg8[%c0_18, %c0_19, %c0_20] : memref<1x32x96xbf16, #tpu.memory_space<vmem>>, vector<1x32x96xbf16>
    %34 = vector.shape_cast %33 : vector<1x32x96xbf16> to vector<32x96xbf16>
    %c0_21 = arith.constant 0 : index
    %c0_22 = arith.constant 0 : index
    %c0_23 = arith.constant 0 : index
    %35 = vector.load %arg9[%c0_21, %c0_22, %c0_23] : memref<1x1x96xbf16, #tpu.memory_space<vmem>>, vector<1x1x96xbf16>
    %36 = vector.shape_cast %35 : vector<1x1x96xbf16> to vector<1x96xbf16>
    %c1_i32 = arith.constant 1 : i32
    %37 = tpu.dynamic_rotate %18 by %c1_i32 dim 1 : vector<1x128xf32>, i32 -> vector<1x128xf32>
    %cst_24 = arith.constant 0.000000e+00 : f32
    %38 = vector.broadcast %cst_24 : f32 to vector<1x128xf32>
    %39 = arith.select %22, %38, %37 : vector<1x128xi1>, vector<1x128xf32>
    %c127_i32_25 = arith.constant 127 : i32
    %40 = tpu.dynamic_rotate %18 by %c127_i32_25 dim 1 : vector<1x128xf32>, i32 -> vector<1x128xf32>
    %cst_26 = arith.constant 0.000000e+00 : f32
    %41 = vector.broadcast %cst_26 : f32 to vector<1x128xf32>
    %42 = arith.select %24, %41, %40 : vector<1x128xi1>, vector<1x128xf32>
    %43 = vector.extract_strided_slice %30 {offsets = [0, 0], sizes = [32, 1], strides = [1, 1]} : vector<32x3xf32> to vector<32x1xf32>
    %44 = vector.broadcast %43 : vector<32x1xf32> to vector<32x128xf32>
    %45 = vector.broadcast %39 : vector<1x128xf32> to vector<32x128xf32>
    %46 = arith.mulf %44, %45 : vector<32x128xf32>
    %47 = vector.extract_strided_slice %30 {offsets = [0, 1], sizes = [32, 1], strides = [1, 1]} : vector<32x3xf32> to vector<32x1xf32>
    %48 = vector.broadcast %47 : vector<32x1xf32> to vector<32x128xf32>
    %49 = vector.broadcast %18 : vector<1x128xf32> to vector<32x128xf32>
    %50 = arith.mulf %48, %49 : vector<32x128xf32>
    %51 = arith.addf %46, %50 : vector<32x128xf32>
    %52 = vector.extract_strided_slice %30 {offsets = [0, 2], sizes = [32, 1], strides = [1, 1]} : vector<32x3xf32> to vector<32x1xf32>
    %53 = vector.broadcast %52 : vector<32x1xf32> to vector<32x128xf32>
    %54 = vector.broadcast %42 : vector<1x128xf32> to vector<32x128xf32>
    %55 = arith.mulf %53, %54 : vector<32x128xf32>
    %56 = arith.addf %51, %55 : vector<32x128xf32>
    %cst_27 = arith.constant 0.000000e+00 : f32
    %57 = vector.broadcast %cst_27 : f32 to vector<32x128xf32>
    %58 = arith.maximumf %56, %57 : vector<32x128xf32>
    %c1_i32_28 = arith.constant 1 : i32
    %59 = tpu.dynamic_rotate %58 by %c1_i32_28 dim 1 : vector<32x128xf32>, i32 -> vector<32x128xf32>
    %cst_29 = arith.constant 0.000000e+00 : f32
    %60 = vector.broadcast %cst_29 : f32 to vector<32x128xf32>
    %61 = arith.select %26, %60, %59 : vector<32x128xi1>, vector<32x128xf32>
    %c127_i32_30 = arith.constant 127 : i32
    %62 = tpu.dynamic_rotate %58 by %c127_i32_30 dim 1 : vector<32x128xf32>, i32 -> vector<32x128xf32>
    %cst_31 = arith.constant 0.000000e+00 : f32
    %63 = vector.broadcast %cst_31 : f32 to vector<32x128xf32>
    %64 = arith.select %28, %63, %62 : vector<32x128xi1>, vector<32x128xf32>
    %65 = tpu.concatenate %61, %58, %64 in 0 : vector<32x128xf32>, vector<32x128xf32>, vector<32x128xf32> -> vector<96x128xf32>
    %66 = arith.truncf %65 : vector<96x128xf32> to vector<96x128xbf16>
    %cst_32 = arith.constant dense<0.000000e+00> : vector<32x128xf32>
    %67 = tpu.matmul %32, %66, %cst_32 {dimension_numbers = #tpu.dot_dimension_numbers<[1], [0], [0], [1], [0, 0, 1, 1], [], []>} : vector<32x96xbf16>, vector<96x128xbf16>, vector<32x128xf32> -> vector<32x128xf32>
    %cst_33 = arith.constant 0.000000e+00 : f32
    %68 = arith.subf %cst_33, %3 : f32
    %69 = vector.broadcast %68 : f32 to vector<32x128xf32>
    %70 = arith.maximumf %69, %67 : vector<32x128xf32>
    %71 = vector.broadcast %3 : f32 to vector<32x128xf32>
    %72 = arith.minimumf %71, %70 : vector<32x128xf32>
    %73 = arith.subf %67, %72 : vector<32x128xf32>
    %c1_i32_34 = arith.constant 1 : i32
    %74 = tpu.dynamic_rotate %73 by %c1_i32_34 dim 1 : vector<32x128xf32>, i32 -> vector<32x128xf32>
    %cst_35 = arith.constant 0.000000e+00 : f32
    %75 = vector.broadcast %cst_35 : f32 to vector<32x128xf32>
    %76 = arith.select %26, %75, %74 : vector<32x128xi1>, vector<32x128xf32>
    %c127_i32_36 = arith.constant 127 : i32
    %77 = tpu.dynamic_rotate %73 by %c127_i32_36 dim 1 : vector<32x128xf32>, i32 -> vector<32x128xf32>
    %cst_37 = arith.constant 0.000000e+00 : f32
    %78 = vector.broadcast %cst_37 : f32 to vector<32x128xf32>
    %79 = arith.select %28, %78, %77 : vector<32x128xi1>, vector<32x128xf32>
    %80 = tpu.concatenate %76, %73, %79 in 0 : vector<32x128xf32>, vector<32x128xf32>, vector<32x128xf32> -> vector<96x128xf32>
    %81 = arith.truncf %80 : vector<96x128xf32> to vector<96x128xbf16>
    %cst_38 = arith.constant dense<0.000000e+00> : vector<32x128xf32>
    %82 = tpu.matmul %34, %81, %cst_38 {dimension_numbers = #tpu.dot_dimension_numbers<[1], [0], [0], [1], [0, 0, 1, 1], [], []>} : vector<32x96xbf16>, vector<96x128xbf16>, vector<32x128xf32> -> vector<32x128xf32>
    %cst_39 = arith.constant 0.000000e+00 : f32
    %83 = vector.broadcast %cst_39 : f32 to vector<32x128xf32>
    %84 = arith.maximumf %82, %83 : vector<32x128xf32>
    %c1_i32_40 = arith.constant 1 : i32
    %85 = tpu.dynamic_rotate %84 by %c1_i32_40 dim 1 : vector<32x128xf32>, i32 -> vector<32x128xf32>
    %cst_41 = arith.constant 0.000000e+00 : f32
    %86 = vector.broadcast %cst_41 : f32 to vector<32x128xf32>
    %87 = arith.select %26, %86, %85 : vector<32x128xi1>, vector<32x128xf32>
    %c127_i32_42 = arith.constant 127 : i32
    %88 = tpu.dynamic_rotate %84 by %c127_i32_42 dim 1 : vector<32x128xf32>, i32 -> vector<32x128xf32>
    %cst_43 = arith.constant 0.000000e+00 : f32
    %89 = vector.broadcast %cst_43 : f32 to vector<32x128xf32>
    %90 = arith.select %28, %89, %88 : vector<32x128xi1>, vector<32x128xf32>
    %91 = tpu.concatenate %87, %84, %90 in 0 : vector<32x128xf32>, vector<32x128xf32>, vector<32x128xf32> -> vector<96x128xf32>
    %92 = arith.truncf %91 : vector<96x128xf32> to vector<96x128xbf16>
    %cst_44 = arith.constant dense<0.000000e+00> : vector<1x128xf32>
    %93 = tpu.matmul %36, %92, %cst_44 {dimension_numbers = #tpu.dot_dimension_numbers<[1], [0], [0], [1], [0, 0, 1, 1], [], []>} : vector<1x96xbf16>, vector<96x128xbf16>, vector<1x128xf32> -> vector<1x128xf32>
    %c1_i32_45 = arith.constant 1 : i32
    %94 = tpu.dynamic_rotate %67 by %c1_i32_45 dim 1 : vector<32x128xf32>, i32 -> vector<32x128xf32>
    %cst_46 = arith.constant 0.000000e+00 : f32
    %95 = vector.broadcast %cst_46 : f32 to vector<32x128xf32>
    %96 = arith.select %26, %95, %94 : vector<32x128xi1>, vector<32x128xf32>
    %c127_i32_47 = arith.constant 127 : i32
    %97 = tpu.dynamic_rotate %67 by %c127_i32_47 dim 1 : vector<32x128xf32>, i32 -> vector<32x128xf32>
    %cst_48 = arith.constant 0.000000e+00 : f32
    %98 = vector.broadcast %cst_48 : f32 to vector<32x128xf32>
    %99 = arith.select %28, %98, %97 : vector<32x128xi1>, vector<32x128xf32>
    %100 = tpu.concatenate %96, %67, %99 in 0 : vector<32x128xf32>, vector<32x128xf32>, vector<32x128xf32> -> vector<96x128xf32>
    %101 = arith.truncf %100 : vector<96x128xf32> to vector<96x128xbf16>
    %cst_49 = arith.constant dense<0.000000e+00> : vector<32x128xf32>
    %102 = tpu.matmul %34, %101, %cst_49 {dimension_numbers = #tpu.dot_dimension_numbers<[1], [0], [0], [1], [0, 0, 1, 1], [], []>} : vector<32x96xbf16>, vector<96x128xbf16>, vector<32x128xf32> -> vector<32x128xf32>
    %cst_50 = arith.constant 0.000000e+00 : f32
    %103 = vector.broadcast %cst_50 : f32 to vector<32x128xf32>
    %104 = arith.maximumf %102, %103 : vector<32x128xf32>
    %c1_i32_51 = arith.constant 1 : i32
    %105 = tpu.dynamic_rotate %104 by %c1_i32_51 dim 1 : vector<32x128xf32>, i32 -> vector<32x128xf32>
    %cst_52 = arith.constant 0.000000e+00 : f32
    %106 = vector.broadcast %cst_52 : f32 to vector<32x128xf32>
    %107 = arith.select %26, %106, %105 : vector<32x128xi1>, vector<32x128xf32>
    %c127_i32_53 = arith.constant 127 : i32
    %108 = tpu.dynamic_rotate %104 by %c127_i32_53 dim 1 : vector<32x128xf32>, i32 -> vector<32x128xf32>
    %cst_54 = arith.constant 0.000000e+00 : f32
    %109 = vector.broadcast %cst_54 : f32 to vector<32x128xf32>
    %110 = arith.select %28, %109, %108 : vector<32x128xi1>, vector<32x128xf32>
    %111 = tpu.concatenate %107, %104, %110 in 0 : vector<32x128xf32>, vector<32x128xf32>, vector<32x128xf32> -> vector<96x128xf32>
    %112 = arith.truncf %111 : vector<96x128xf32> to vector<96x128xbf16>
    %cst_55 = arith.constant dense<0.000000e+00> : vector<1x128xf32>
    %113 = tpu.matmul %36, %112, %cst_55 {dimension_numbers = #tpu.dot_dimension_numbers<[1], [0], [0], [1], [0, 0, 1, 1], [], []>} : vector<1x96xbf16>, vector<96x128xbf16>, vector<1x128xf32> -> vector<1x128xf32>
    %c0_56 = arith.constant 0 : index
    %c0_57 = arith.constant 0 : index
    %c0_58 = arith.constant 0 : index
    %114 = vector.load %arg10[%c0_56, %c0_57, %c0_58] : memref<1x1x128xf32, #tpu.memory_space<vmem>>, vector<1x1x128xf32>
    %115 = vector.shape_cast %114 : vector<1x1x128xf32> to vector<1x128xf32>
    %116 = vector.shape_cast %93 : vector<1x128xf32> to vector<1x1x128xf32>
    tpu.vector_store %arg10[%c0_56, %c0_57, %c0_58], %116 {strides = array<i32>} : memref<1x1x128xf32, #tpu.memory_space<vmem>>, vector<1x1x128xf32>,
    %117 = arith.subf %113, %18 : vector<1x128xf32>
    %118 = vector.shape_cast %117 : vector<1x128xf32> to vector<1x1x1x128xf32>
    %c0_59 = arith.constant 0 : index
    %c0_60 = arith.constant 0 : index
    %c0_61 = arith.constant 0 : index
    %c0_62 = arith.constant 0 : index
    %119 = vector.load %arg11[%c0_59, %c0_60, %c0_61, %c0_62] : memref<1x1x1x128xf32, #tpu.memory_space<vmem>>, vector<1x1x1x128xf32>
    tpu.vector_store %arg11[%c0_59, %c0_60, %c0_61, %c0_62], %118 {strides = array<i32>} : memref<1x1x1x128xf32, #tpu.memory_space<vmem>>, vector<1x1x1x128xf32>,
    return
  }
  func.func @transform_0(%arg0: i32, %arg1: i32) -> (i32, i32) {
    %c0_i32 = arith.constant 0 : i32
    %c0_i32_0 = arith.constant 0 : i32
    %c0_i32_1 = arith.constant 0 : i32
    return %c0_i32, %c0_i32_0 : i32, i32
  }
  func.func @transform_1(%arg0: i32, %arg1: i32) -> (i32, i32, i32) {
    %c0_i32 = arith.constant 0 : i32
    %c0_i32_0 = arith.constant 0 : i32
    %c0_i32_1 = arith.constant 0 : i32
    return %arg0, %c0_i32, %c0_i32_0 : i32, i32, i32
  }
  func.func @transform_2(%arg0: i32, %arg1: i32) -> (i32, i32) {
    %c0_i32 = arith.constant 0 : i32
    %c0_i32_0 = arith.constant 0 : i32
    %c0_i32_1 = arith.constant 0 : i32
    return %c0_i32, %c0_i32_0 : i32, i32
  }
  func.func @transform_3(%arg0: i32, %arg1: i32) -> (i32, i32, i32) {
    %c0_i32 = arith.constant 0 : i32
    %c0_i32_0 = arith.constant 0 : i32
    %c0_i32_1 = arith.constant 0 : i32
    return %arg0, %c0_i32, %c0_i32_0 : i32, i32, i32
  }
  func.func @transform_4(%arg0: i32, %arg1: i32) -> (i32, i32, i32) {
    %c0_i32 = arith.constant 0 : i32
    %c0_i32_0 = arith.constant 0 : i32
    %c0_i32_1 = arith.constant 0 : i32
    return %arg1, %c0_i32, %c0_i32_0 : i32, i32, i32
  }
  func.func @transform_5(%arg0: i32, %arg1: i32) -> (i32, i32, i32) {
    %c0_i32 = arith.constant 0 : i32
    %c0_i32_0 = arith.constant 0 : i32
    %c0_i32_1 = arith.constant 0 : i32
    return %arg1, %c0_i32, %c0_i32_0 : i32, i32, i32
  }
  func.func @transform_6(%arg0: i32, %arg1: i32) -> (i32, i32, i32) {
    %c0_i32 = arith.constant 0 : i32
    %c0_i32_0 = arith.constant 0 : i32
    %c0_i32_1 = arith.constant 0 : i32
    return %arg1, %c0_i32, %c0_i32_0 : i32, i32, i32
  }
  func.func @transform_7(%arg0: i32, %arg1: i32) -> (i32, i32, i32) {
    %c0_i32 = arith.constant 0 : i32
    %c0_i32_0 = arith.constant 0 : i32
    %c0_i32_1 = arith.constant 0 : i32
    return %arg1, %c0_i32, %c0_i32_0 : i32, i32, i32
  }
  func.func @transform_8(%arg0: i32, %arg1: i32) -> (i32, i32, i32) {
    %c0_i32 = arith.constant 0 : i32
    %c0_i32_0 = arith.constant 0 : i32
    %c0_i32_1 = arith.constant 0 : i32
    return %arg0, %c0_i32, %c0_i32_0 : i32, i32, i32
  }
  func.func @transform_9(%arg0: i32, %arg1: i32) -> (i32, i32, i32, i32) {
    %c0_i32 = arith.constant 0 : i32
    %c0_i32_0 = arith.constant 0 : i32
    %c0_i32_1 = arith.constant 0 : i32
    return %arg1, %arg0, %c0_i32, %c0_i32_0 : i32, i32, i32, i32
  }
}

</mosaic_0001>

<llo_original>
// kernel: ista_net1d_forward.1
$region0: #{ista_net1d_forward.1}
  #allocation0 [shape = 'u32[]', space=smem, size = 0x4, offset = 0x4, fixed_abs, tag = 'smem constant byte address 0x4 - core index']
  #allocation1 [shape = 'u32[144,128]{1,0:T(1,128)}', space=vmem, size = 0x12000, scoped, tag = 'internal scratch']
  %s0 = inlined_call_operand.vmem [shape: f32[3,2], index: 0, kind: input, shape index: {}]
  %s1 = inlined_call_operand.vmem [shape: f32[2,1,128], index: 1, kind: input, shape index: {}]
  %s2 = inlined_call_operand.vmem [shape: f32[128,128], index: 2, kind: input, shape index: {}]
  %s3 = inlined_call_operand.vmem [shape: f32[2,1,128], index: 3, kind: input, shape index: {}]
  %s4 = inlined_call_operand.vmem [shape: f32[3,32,3], index: 4, kind: input, shape index: {}]
  %s5 = inlined_call_operand.vmem [shape: bf16[3,32,96], index: 5, kind: input, shape index: {}]
  %s6 = inlined_call_operand.vmem [shape: bf16[3,32,96], index: 6, kind: input, shape index: {}]
  %s7 = inlined_call_operand.vmem [shape: bf16[3,1,96], index: 7, kind: input, shape index: {}]
  %s8 = inlined_call_operand.hbm [shape: f32[2,1,128], index: 8, kind: output, shape index: {0}]
  %s9 = inlined_call_operand.vmem [shape: f32[3,2,1,128], index: 9, kind: output, shape index: {1}]
  %10 = xla_tuple %s8, %s9
  %s11 = sld [smem:[#allocation0]]
  $region81: #{ista_net1d_forward.1} parent=0
    _
  %s13 = ssub.s32 1, %s11
  %s14 = scalar_select 0, %s13, %s11
  $region1: #{ista_net1d_forward.1} parent=0
    #allocation2 [shape = 'u8[2048]{0}', space=smem, size = 0x800, scoped, tag = 'input window, operand 0, single buffered']
    #allocation3 [shape = 's32[2]{0}', space=sflag, size = 0x8, scoped, tag = 'scoped memory for ista_net1d_forward.1']
    #allocation4 [shape = 's32[2]{0}', space=sflag, size = 0x8, scoped, tag = 'scoped memory for ista_net1d_forward.1']
    #allocation5 [shape = 'u8[1024]{0}', space=vmem, size = 0x400, scoped, tag = 'output window, operand 0']
    %15 = vsyncpa [#allocation4], 0
    %16 = vsyncpa [#allocation3], 0
    %s17 = scalar_lea.sflag [#allocation3], 1
    %18 = vsyncpa %s17, 0
    loop: start=0, step=1, limit=8
    $region2: #{ista_net1d_forward.1} parent=1 // loop_pre_header
      _
    $region3: #{ista_net1d_forward.1} parent=1 // loop_header
      %s20 = sphi 0, %s24
      %p21 = scmp.ge.s32.totalorder %s20, 8
      %s27 = sphi 0, %s39
      %s28 = sphi 0, %s35
      %s29 = sphi 0, %s27
      %s30 = sphi 0, %s28
      %s31 = sphi 0, %s29
      %s32 = sphi 0, %s30
      %s40 = sphi 0, %s40
      %s42 = sphi 0, %s40
      %s43 = sphi 0, %s42
      %s57 = sphi 0, %s43
      %s63 = sphi 0, %s65
      %s66 = sphi 0, %s63
      %s67 = sphi 0, %s66
      %s83 = sphi 0, %s67
      %s87 = sphi 0, %s87
      %s89 = sphi 0, %s87
      %s90 = sphi 0, %s89
      %s104 = sphi 0, %s90
      %s110 = sphi 0, %s112
      %s113 = sphi 0, %s110
      %s114 = sphi 0, %s113
      %s130 = sphi 0, %s114
      %s136 = sphi 0, %s138
      %s139 = sphi 0, %s136
      %s140 = sphi 0, %s139
      %s156 = sphi 0, %s140
      %s162 = sphi 0, %s164
      %s165 = sphi 0, %s162
      %s166 = sphi 0, %s165
      %s182 = sphi 0, %s166
      %s188 = sphi 0, %s190
      %s191 = sphi 0, %s188
      %s192 = sphi 0, %s191
      %s208 = sphi 0, %s192
      %s214 = sphi 0, %s216
      %s217 = sphi 0, %s214
      %s218 = sphi 0, %s217
      %s234 = sphi 0, %s218
      %s240 = sphi 0, %s242
      %s243 = sphi 0, %s240
      %s244 = sphi 0, %s243
      %s260 = sphi 0, %s244
      %s268 = sphi 0, %s270
      %s271 = sphi 0, %s268
      %s272 = sphi 0, %s271
      %s288 = sphi 0, %s272
    $region4: #{ista_net1d_forward.1} parent=1 // loop_header_branch
      %23 = sbr.rel (%p21) target = $region8
    $region5: #{ista_net1d_forward.1} parent=1 // loop_body
      %s25 = ssub.s32 %s20, 1
      %s26 = ssub.s32 %s20, 2
      %s33 = sadd.s32 1, %s28
      %p34 = scmp.ge.s32.totalorder %s33, 3
      %s35 = scalar_select %p34, 0, %s33
      %s36 = sadd.s32 1, %s27
      %s37 = scalar_select %p34, %s36, %s27
      %p38 = scmp.ge.s32.totalorder %s37, 2
      %s39 = scalar_select %p38, 0, %s37
      %s41 = sadd.s32 %s40, 1
      %p44 = scmp.eq.s32.totalorder %s20, 5
      %p45 = scmp.ne.s32.totalorder %s40, %s42
      %p46 = scmp.eq.s32.totalorder %s20, 0
      %p47 = por %p45, %p46
      %p48 = scmp.ne.s32.totalorder %s40, %s42
      %p49 = scmp.eq.s32.totalorder %s25, 5
      %p50 = por %p48, %p49
      %p51 = scmp.ne.s32.totalorder %s42, %s43
      %p52 = scmp.eq.s32.totalorder %s25, 0
      %p53 = por %p51, %p52
      %p54 = scmp.ne.s32.totalorder %s42, %s43
      %p55 = scmp.eq.s32.totalorder %s26, 5
      %p56 = por %p54, %p55
      %p58 = scmp.ne.s32.totalorder %s43, %s57
      %p59 = scmp.eq.s32.totalorder %s26, 0
      %p60 = por %p58, %p59
      %s61 = ssub.s32 %s27, %s39
      %p62 = scmp.eq.s32.totalorder %s61, 0
      %s64 = sadd.s32 %s63, 1
      %s65 = scalar_select %p62, %s63, %s64
      %p68 = pneg %p62
      %p69 = scmp.eq.s32.totalorder %s20, 5
      %p70 = por %p68, %p69
      %p71 = scmp.ne.s32.totalorder %s63, %s66
      %p72 = scmp.eq.s32.totalorder %s20, 0
      %p73 = por %p71, %p72
      %p74 = scmp.ne.s32.totalorder %s63, %s66
      %p75 = scmp.eq.s32.totalorder %s25, 5
      %p76 = por %p74, %p75
      %p77 = scmp.ne.s32.totalorder %s66, %s67
      %p78 = scmp.eq.s32.totalorder %s25, 0
      %p79 = por %p77, %p78
      %p80 = scmp.ne.s32.totalorder %s66, %s67
      %p81 = scmp.eq.s32.totalorder %s26, 5
      %p82 = por %p80, %p81
      %p84 = scmp.ne.s32.totalorder %s67, %s83
      %p85 = scmp.eq.s32.totalorder %s26, 0
      %p86 = por %p84, %p85
      %s88 = sadd.s32 %s87, 1
      %p91 = scmp.eq.s32.totalorder %s20, 5
      %p92 = scmp.ne.s32.totalorder %s87, %s89
      %p93 = scmp.eq.s32.totalorder %s20, 0
      %p94 = por %p92, %p93
      %p95 = scmp.ne.s32.totalorder %s87, %s89
      %p96 = scmp.eq.s32.totalorder %s25, 5
      %p97 = por %p95, %p96
      %p98 = scmp.ne.s32.totalorder %s89, %s90
      %p99 = scmp.eq.s32.totalorder %s25, 0
      %p100 = por %p98, %p99
      %p101 = scmp.ne.s32.totalorder %s89, %s90
      %p102 = scmp.eq.s32.totalorder %s26, 5
      %p103 = por %p101, %p102
      %p105 = scmp.ne.s32.totalorder %s90, %s104
      %p106 = scmp.eq.s32.totalorder %s26, 0
      %p107 = por %p105, %p106
      %s108 = ssub.s32 %s27, %s39
      %p109 = scmp.eq.s32.totalorder %s108, 0
      %s111 = sadd.s32 %s110, 1
      %s112 = scalar_select %p109, %s110, %s111
      %p115 = pneg %p109
      %p116 = scmp.eq.s32.totalorder %s20, 5
      %p117 = por %p115, %p116
      %p118 = scmp.ne.s32.totalorder %s110, %s113
      %p119 = scmp.eq.s32.totalorder %s20, 0
      %p120 = por %p118, %p119
      %p121 = scmp.ne.s32.totalorder %s110, %s113
      %p122 = scmp.eq.s32.totalorder %s25, 5
      %p123 = por %p121, %p122
      %p124 = scmp.ne.s32.totalorder %s113, %s114
      %p125 = scmp.eq.s32.totalorder %s25, 0
      %p126 = por %p124, %p125
      %p127 = scmp.ne.s32.totalorder %s113, %s114
      %p128 = scmp.eq.s32.totalorder %s26, 5
      %p129 = por %p127, %p128
      %p131 = scmp.ne.s32.totalorder %s114, %s130
      %p132 = scmp.eq.s32.totalorder %s26, 0
      %p133 = por %p131, %p132
      %s134 = ssub.s32 %s28, %s35
      %p135 = scmp.eq.s32.totalorder %s134, 0
      %s137 = sadd.s32 %s136, 1
      %s138 = scalar_select %p135, %s136, %s137
      %p141 = pneg %p135
      %p142 = scmp.eq.s32.totalorder %s20, 5
      %p143 = por %p141, %p142
      %p144 = scmp.ne.s32.totalorder %s136, %s139
      %p145 = scmp.eq.s32.totalorder %s20, 0
      %p146 = por %p144, %p145
      %p147 = scmp.ne.s32.totalorder %s136, %s139
      %p148 = scmp.eq.s32.totalorder %s25, 5
      %p149 = por %p147, %p148
      %p150 = scmp.ne.s32.totalorder %s139, %s140
      %p151 = scmp.eq.s32.totalorder %s25, 0
      %p152 = por %p150, %p151
      %p153 = scmp.ne.s32.totalorder %s139, %s140
      %p154 = scmp.eq.s32.totalorder %s26, 5
      %p155 = por %p153, %p154
      %p157 = scmp.ne.s32.totalorder %s140, %s156
      %p158 = scmp.eq.s32.totalorder %s26, 0
      %p159 = por %p157, %p158
      %s160 = ssub.s32 %s28, %s35
      %p161 = scmp.eq.s32.totalorder %s160, 0
      %s163 = sadd.s32 %s162, 1
      %s164 = scalar_select %p161, %s162, %s163
      %p167 = pneg %p161
      %p168 = scmp.eq.s32.totalorder %s20, 5
      %p169 = por %p167, %p168
      %p170 = scmp.ne.s32.totalorder %s162, %s165
      %p171 = scmp.eq.s32.totalorder %s20, 0
      %p172 = por %p170, %p171
      %p173 = scmp.ne.s32.totalorder %s162, %s165
      %p174 = scmp.eq.s32.totalorder %s25, 5
      %p175 = por %p173, %p174
      %p176 = scmp.ne.s32.totalorder %s165, %s166
      %p177 = scmp.eq.s32.totalorder %s25, 0
      %p178 = por %p176, %p177
      %p179 = scmp.ne.s32.totalorder %s165, %s166
      %p180 = scmp.eq.s32.totalorder %s26, 5
      %p181 = por %p179, %p180
      %p183 = scmp.ne.s32.totalorder %s166, %s182
      %p184 = scmp.eq.s32.totalorder %s26, 0
      %p185 = por %p183, %p184
      %s186 = ssub.s32 %s28, %s35
      %p187 = scmp.eq.s32.totalorder %s186, 0
      %s189 = sadd.s32 %s188, 1
      %s190 = scalar_select %p187, %s188, %s189
      %p193 = pneg %p187
      %p194 = scmp.eq.s32.totalorder %s20, 5
      %p195 = por %p193, %p194
      %p196 = scmp.ne.s32.totalorder %s188, %s191
      %p197 = scmp.eq.s32.totalorder %s20, 0
      %p198 = por %p196, %p197
      %p199 = scmp.ne.s32.totalorder %s188, %s191
      %p200 = scmp.eq.s32.totalorder %s25, 5
      %p201 = por %p199, %p200
      %p202 = scmp.ne.s32.totalorder %s191, %s192
      %p203 = scmp.eq.s32.totalorder %s25, 0
      %p204 = por %p202, %p203
      %p205 = scmp.ne.s32.totalorder %s191, %s192
      %p206 = scmp.eq.s32.totalorder %s26, 5
      %p207 = por %p205, %p206
      %p209 = scmp.ne.s32.totalorder %s192, %s208
      %p210 = scmp.eq.s32.totalorder %s26, 0
      %p211 = por %p209, %p210
      %s212 = ssub.s32 %s28, %s35
      %p213 = scmp.eq.s32.totalorder %s212, 0
      %s215 = sadd.s32 %s214, 1
      %s216 = scalar_select %p213, %s214, %s215
      %p219 = pneg %p213
      %p220 = scmp.eq.s32.totalorder %s20, 5
      %p221 = por %p219, %p220
      %p222 = scmp.ne.s32.totalorder %s214, %s217
      %p223 = scmp.eq.s32.totalorder %s20, 0
      %p224 = por %p222, %p223
      %p225 = scmp.ne.s32.totalorder %s214, %s217
      %p226 = scmp.eq.s32.totalorder %s25, 5
      %p227 = por %p225, %p226
      %p228 = scmp.ne.s32.totalorder %s217, %s218
      %p229 = scmp.eq.s32.totalorder %s25, 0
      %p230 = por %p228, %p229
      %p231 = scmp.ne.s32.totalorder %s217, %s218
      %p232 = scmp.eq.s32.totalorder %s26, 5
      %p233 = por %p231, %p232
      %p235 = scmp.ne.s32.totalorder %s218, %s234
      %p236 = scmp.eq.s32.totalorder %s26, 0
      %p237 = por %p235, %p236
      %s238 = ssub.s32 %s27, %s39
      %p239 = scmp.eq.s32.totalorder %s238, 0
      %s241 = sadd.s32 %s240, 1
      %s242 = scalar_select %p239, %s240, %s241
      %p245 = pneg %p239
      %p246 = scmp.eq.s32.totalorder %s20, 5
      %p247 = por %p245, %p246
      %p248 = scmp.ne.s32.totalorder %s240, %s243
      %p249 = scmp.eq.s32.totalorder %s20, 0
      %p250 = por %p248, %p249
      %p251 = scmp.ne.s32.totalorder %s240, %s243
      %p252 = scmp.eq.s32.totalorder %s25, 5
      %p253 = por %p251, %p252
      %p254 = scmp.ne.s32.totalorder %s243, %s244
      %p255 = scmp.eq.s32.totalorder %s25, 0
      %p256 = por %p254, %p255
      %p257 = scmp.ne.s32.totalorder %s243, %s244
      %p258 = scmp.eq.s32.totalorder %s26, 5
      %p259 = por %p257, %p258
      %p261 = scmp.ne.s32.totalorder %s244, %s260
      %p262 = scmp.eq.s32.totalorder %s26, 0
      %p263 = por %p261, %p262
      %s264 = ssub.s32 %s28, %s35
      %s265 = ssub.s32 %s27, %s39
      %s266 = sor.u32 %s264, %s265
      %p267 = scmp.eq.s32.totalorder %s266, 0
      %s269 = sadd.s32 %s268, 1
      %s270 = scalar_select %p267, %s268, %s269
      %p273 = pneg %p267
      %p274 = scmp.eq.s32.totalorder %s20, 5
      %p275 = por %p273, %p274
      %p276 = scmp.ne.s32.totalorder %s268, %s271
      %p277 = scmp.eq.s32.totalorder %s20, 0
      %p278 = por %p276, %p277
      %p279 = scmp.ne.s32.totalorder %s268, %s271
      %p280 = scmp.eq.s32.totalorder %s25, 5
      %p281 = por %p279, %p280
      %p282 = scmp.ne.s32.totalorder %s271, %s272
      %p283 = scmp.eq.s32.totalorder %s25, 0
      %p284 = por %p282, %p283
      %p285 = scmp.ne.s32.totalorder %s271, %s272
      %p286 = scmp.eq.s32.totalorder %s26, 5
      %p287 = por %p285, %p286
      %p289 = scmp.ne.s32.totalorder %s272, %s288
      %p290 = scmp.eq.s32.totalorder %s26, 0
      %p291 = por %p289, %p290
      %p292 = scmp.le.s32.totalorder 1, %s20
      %p293 = scmp.lt.s32.totalorder %s20, 7
      %p294 = pnand %p292, %p293
      %p295 = pneg %p294
      // Predicated region
      $region9: #{ista_net1d_forward.1} parent=5 // pred_check
        _
      $region10: #{ista_net1d_forward.1} parent=5 // pred_check_branch
        %297 = sbr.rel (%p294) target = $region12
      $region11: #{ista_net1d_forward.1} parent=5 // pred_region
        %s298 = ssub.s32 %s20, 1
        // Predicated region
        $region13: #{ista_net1d_forward.1} parent=11 // pred_check
          %p299 = pneg %p53
        $region14: #{ista_net1d_forward.1} parent=11 // pred_check_branch
          %301 = sbr.rel (%p299) target = $region16
        $region15: #{ista_net1d_forward.1} parent=11 // pred_region
          %s303 = ssub.s32 64, 64
          %304 = vsyncadd [#allocation4], %s303
          %s306 = sshll.u32 %s0, 4
          %s307 = int_to_ptr.vmem [resolvable:$true] %s306
          %309 = dma.vmem_to_smem %s307, 64, [#allocation2], [#allocation4]
        $region16: #{ista_net1d_forward.1} parent=11 // pred_fallthru
          _
        // Predicated region
        $region17: #{ista_net1d_forward.1} parent=11 // pred_check
          %p310 = pneg %p100
        $region18: #{ista_net1d_forward.1} parent=11 // pred_check_branch
          %312 = sbr.rel (%p310) target = $region20
        $region19: #{ista_net1d_forward.1} parent=11 // pred_region
          _
        $region20: #{ista_net1d_forward.1} parent=11 // pred_fallthru
          _
      $region12: #{ista_net1d_forward.1} parent=5 // pred_fallthru
        _
      %p313 = scmp.lt.s32.totalorder %s20, 6
      // Predicated region
      $region21: #{ista_net1d_forward.1} parent=5 // pred_check
        %p314 = pneg %p313
      $region22: #{ista_net1d_forward.1} parent=5 // pred_check_branch
        %316 = sbr.rel (%p314) target = $region24
      $region23: #{ista_net1d_forward.1} parent=5 // pred_region
        // Predicated region
        $region25: #{ista_net1d_forward.1} parent=23 // pred_check
          %p317 = pneg %p73
        $region26: #{ista_net1d_forward.1} parent=23 // pred_check_branch
          %319 = sbr.rel (%p317) target = $region28
        $region27: #{ista_net1d_forward.1} parent=23 // pred_region
          %p320 = scmp.lt.s32.totalorder %s27, 1
          %s321 = scalar_select %p320, %s27, 1
          %s322 = scalar_lea.vmem %s1, %s321
        $region28: #{ista_net1d_forward.1} parent=23 // pred_fallthru
          _
        // Predicated region
        $region29: #{ista_net1d_forward.1} parent=23 // pred_check
          %p323 = pneg %p120
        $region30: #{ista_net1d_forward.1} parent=23 // pred_check_branch
          %325 = sbr.rel (%p323) target = $region32
        $region31: #{ista_net1d_forward.1} parent=23 // pred_region
          %p326 = scmp.lt.s32.totalorder %s27, 1
          %s327 = scalar_select %p326, %s27, 1
          %s328 = scalar_lea.vmem %s3, %s327
        $region32: #{ista_net1d_forward.1} parent=23 // pred_fallthru
          _
        // Predicated region
        $region33: #{ista_net1d_forward.1} parent=23 // pred_check
          %p329 = pneg %p146
        $region34: #{ista_net1d_forward.1} parent=23 // pred_check_branch
          %331 = sbr.rel (%p329) target = $region36
        $region35: #{ista_net1d_forward.1} parent=23 // pred_region
          %p332 = scmp.lt.s32.totalorder %s28, 2
          %s333 = scalar_select %p332, %s28, 2
          %s334 = smul.addr %s333, 4
          %s335 = smul.addr %s334, 8
          %s336 = scalar_lea.vmem %s4, %s335
        $region36: #{ista_net1d_forward.1} parent=23 // pred_fallthru
          _
        // Predicated region
        $region37: #{ista_net1d_forward.1} parent=23 // pred_check
          %p337 = pneg %p172
        $region38: #{ista_net1d_forward.1} parent=23 // pred_check_branch
          %339 = sbr.rel (%p337) target = $region40
        $region39: #{ista_net1d_forward.1} parent=23 // pred_region
          %p340 = scmp.lt.s32.totalorder %s28, 2
          %s341 = scalar_select %p340, %s28, 2
          %s342 = smul.addr %s341, 4
          %s343 = smul.addr %s342, 4
          %s344 = scalar_lea.vmem %s5, %s343
        $region40: #{ista_net1d_forward.1} parent=23 // pred_fallthru
          _
        // Predicated region
        $region41: #{ista_net1d_forward.1} parent=23 // pred_check
          %p345 = pneg %p198
        $region42: #{ista_net1d_forward.1} parent=23 // pred_check_branch
          %347 = sbr.rel (%p345) target = $region44
        $region43: #{ista_net1d_forward.1} parent=23 // pred_region
          %p348 = scmp.lt.s32.totalorder %s28, 2
          %s349 = scalar_select %p348, %s28, 2
          %s350 = smul.addr %s349, 4
          %s351 = smul.addr %s350, 4
          %s352 = scalar_lea.vmem %s6, %s351
        $region44: #{ista_net1d_forward.1} parent=23 // pred_fallthru
          _
        // Predicated region
        $region45: #{ista_net1d_forward.1} parent=23 // pred_check
          %p353 = pneg %p224
        $region46: #{ista_net1d_forward.1} parent=23 // pred_check_branch
          %355 = sbr.rel (%p353) target = $region48
        $region47: #{ista_net1d_forward.1} parent=23 // pred_region
          %p356 = scmp.lt.s32.totalorder %s28, 2
          %s357 = scalar_select %p356, %s28, 2
          %s358 = scalar_lea.vmem %s7, %s357
        $region48: #{ista_net1d_forward.1} parent=23 // pred_fallthru
          _
      $region24: #{ista_net1d_forward.1} parent=5 // pred_fallthru
        _
      %p359 = scmp.le.s32.totalorder 1, %s20
      %p360 = scmp.lt.s32.totalorder %s20, 7
      %p361 = pnand %p359, %p360
      %p362 = pneg %p361
      // Predicated region
      $region49: #{ista_net1d_forward.1} parent=5 // pred_check
        _
      $region50: #{ista_net1d_forward.1} parent=5 // pred_check_branch
        %364 = sbr.rel (%p361) target = $region52
      $region51: #{ista_net1d_forward.1} parent=5 // pred_region
        %s365 = ssub.s32 %s20, 1
        // Predicated region
        $region53: #{ista_net1d_forward.1} parent=51 // pred_check
          %p366 = pneg %p53
        $region54: #{ista_net1d_forward.1} parent=51 // pred_check_branch
          %368 = sbr.rel (%p366) target = $region56
        $region55: #{ista_net1d_forward.1} parent=51 // pred_region
          %369 = dma.done [#allocation4], 64
        $region56: #{ista_net1d_forward.1} parent=51 // pred_fallthru
          _
        %370 = sfence
        %p371 = pneg %p53
        %p372 = pneg %p50
        %p373 = scmp.lt.s32.totalorder %s29, 1
        %s374 = scalar_select %p373, %s29, 1
        %s375 = scalar_lea.vmem %s1, %s374
        %p376 = pneg %p79
        %p377 = pneg %p76
        %p378 = pneg %p100
        %p379 = pneg %p97
        %p380 = scmp.lt.s32.totalorder %s29, 1
        %s381 = scalar_select %p380, %s29, 1
        %s382 = scalar_lea.vmem %s3, %s381
        %p383 = pneg %p126
        %p384 = pneg %p123
        %p385 = scmp.lt.s32.totalorder %s30, 2
        %s386 = scalar_select %p385, %s30, 2
        %s387 = smul.addr %s386, 4
        %s388 = smul.addr %s387, 8
        %s389 = scalar_lea.vmem %s4, %s388
        %p390 = pneg %p152
        %p391 = pneg %p149
        %p392 = scmp.lt.s32.totalorder %s30, 2
        %s393 = scalar_select %p392, %s30, 2
        %s394 = smul.addr %s393, 4
        %s395 = smul.addr %s394, 4
        %s396 = scalar_lea.vmem %s5, %s395
        %p397 = pneg %p178
        %p398 = pneg %p175
        %p399 = scmp.lt.s32.totalorder %s30, 2
        %s400 = scalar_select %p399, %s30, 2
        %s401 = smul.addr %s400, 4
        %s402 = smul.addr %s401, 4
        %s403 = scalar_lea.vmem %s6, %s402
        %p404 = pneg %p204
        %p405 = pneg %p201
        %p406 = scmp.lt.s32.totalorder %s30, 2
        %s407 = scalar_select %p406, %s30, 2
        %s408 = scalar_lea.vmem %s7, %s407
        %p409 = pneg %p230
        %p410 = pneg %p227
        %p411 = pneg %p256
        %p412 = pneg %p253
        %s413 = sand.u32 %s243, 1
        %s414 = scalar_lea.sflag [#allocation3], %s413
        %s415 = sand.u32 %s243, 1
        %s416 = scalar_lea.vmem [#allocation5], %s415
        %p417 = pneg %p284
        %p418 = pneg %p281
        %p419 = scmp.lt.s32.totalorder %s30, 2
        %s420 = scalar_select %p419, %s30, 2
        %p421 = scmp.lt.s32.totalorder %s29, 1
        %s422 = scalar_select %p421, %s29, 1
        %s423 = smul.addr %s420, 2
        %s424 = sadd.s32 %s422, %s423
        %s425 = scalar_lea.vmem %s9, %s424
        %p426 = scmp.lt.s32.totalorder %s29, 1
        %s427 = scalar_select %p426, %s29, 1
        %s428 = scalar_lea.vmem %s1, %s427
        %p429 = scmp.lt.s32.totalorder %s29, 1
        %s430 = scalar_select %p429, %s29, 1
        %s431 = scalar_lea.vmem %s3, %s430
        %p432 = scmp.lt.s32.totalorder %s30, 2
        %s433 = scalar_select %p432, %s30, 2
        %s434 = smul.addr %s433, 4
        %s435 = smul.addr %s434, 8
        %s436 = scalar_lea.vmem %s4, %s435
        %p437 = scmp.lt.s32.totalorder %s30, 2
        %s438 = scalar_select %p437, %s30, 2
        %s439 = smul.addr %s438, 4
        %s440 = smul.addr %s439, 4
        %s441 = scalar_lea.vmem %s5, %s440
        %p442 = scmp.lt.s32.totalorder %s30, 2
        %s443 = scalar_select %p442, %s30, 2
        %s444 = smul.addr %s443, 4
        %s445 = smul.addr %s444, 4
        %s446 = scalar_lea.vmem %s6, %s445
        %p447 = scmp.lt.s32.totalorder %s30, 2
        %s448 = scalar_select %p447, %s30, 2
        %s449 = scalar_lea.vmem %s7, %s448
        %p450 = scmp.lt.s32.totalorder %s30, 2
        %s451 = scalar_select %p450, %s30, 2
        %p452 = scmp.lt.s32.totalorder %s29, 1
        %s453 = scalar_select %p452, %s29, 1
        %s454 = smul.addr %s451, 2
        %s455 = sadd.s32 %s453, %s454
        %s456 = scalar_lea.vmem %s9, %s455
        %s458 = smul.u32 %s30, 128
        %s459 = sld [smem:[#allocation2 + %s458]]
        %s460 = sadd.s32 %s458, 1
        %s461 = sld [smem:[#allocation2 + %s460]]
        %p462 = scmp.eq.s32.totalorder %s30, 0
        // Predicated region
        $region57: #{ista_net1d_forward.1} parent=51 // pred_check
          %p463 = pneg %p462
        $region58: #{ista_net1d_forward.1} parent=51 // pred_check_branch
          %465 = sbr.rel (%p463) target = $region60
        $region59: #{ista_net1d_forward.1} parent=51 // pred_region
          %v466 = vld [vmem:[%s428] sm:$0x1]
          %467 = vst [vmem:[%s416] sm:$0x1] %v466
        $region60: #{ista_net1d_forward.1} parent=51 // pred_fallthru
          _
        %v468 = vld [vmem:[%s416] sm:$0x1]
        %v469 = vld [vmem:[%s2] sm:$0xff]
        %v470 = vld [vmem:[%s2 + $0x8] sm:$0xff]
        %v471 = vld [vmem:[%s2 + $0x10] sm:$0xff]
        %v472 = vld [vmem:[%s2 + $0x18] sm:$0xff]
        %v473 = vld [vmem:[%s2 + $0x20] sm:$0xff]
        %v474 = vld [vmem:[%s2 + $0x28] sm:$0xff]
        %v475 = vld [vmem:[%s2 + $0x30] sm:$0xff]
        %v476 = vld [vmem:[%s2 + $0x38] sm:$0xff]
        %v477 = vld [vmem:[%s2 + $0x40] sm:$0xff]
        %v478 = vld [vmem:[%s2 + $0x48] sm:$0xff]
        %v479 = vld [vmem:[%s2 + $0x50] sm:$0xff]
        %v480 = vld [vmem:[%s2 + $0x58] sm:$0xff]
        %v481 = vld [vmem:[%s2 + $0x60] sm:$0xff]
        %v482 = vld [vmem:[%s2 + $0x68] sm:$0xff]
        %v483 = vld [vmem:[%s2 + $0x70] sm:$0xff]
        %v484 = vld [vmem:[%s2 + $0x78] sm:$0xff]
        %485 = vmatprep.subr.mxu0 0.0
        %486 = vmatpush1.msra.mxu0 %v469
        %487 = vmatprep.subr.mxu0 0.0
        %488 = vmatpush1.msra.mxu0 %v470
        %489 = vmatprep.subr.mxu0 0.0
        %490 = vmatpush1.msra.mxu0 %v471
        %491 = vmatprep.subr.mxu0 0.0
        %492 = vmatpush1.msra.mxu0 %v472
        %493 = vmatprep.subr.mxu0 0.0
        %494 = vmatpush1.msra.mxu0 %v473
        %495 = vmatprep.subr.mxu0 0.0
        %496 = vmatpush1.msra.mxu0 %v474
        %497 = vmatprep.subr.mxu0 0.0
        %498 = vmatpush1.msra.mxu0 %v475
        %499 = vmatprep.subr.mxu0 0.0
        %500 = vmatpush1.msra.mxu0 %v476
        %501 = vmatprep.subr.mxu0 0.0
        %502 = vmatpush1.msra.mxu0 %v477
        %503 = vmatprep.subr.mxu0 0.0
        %504 = vmatpush1.msra.mxu0 %v478
        %505 = vmatprep.subr.mxu0 0.0
        %506 = vmatpush1.msra.mxu0 %v479
        %507 = vmatprep.subr.mxu0 0.0
        %508 = vmatpush1.msra.mxu0 %v480
        %509 = vmatprep.subr.mxu0 0.0
        %510 = vmatpush1.msra.mxu0 %v481
        %511 = vmatprep.subr.mxu0 0.0
        %512 = vmatpush1.msra.mxu0 %v482
        %513 = vmatprep.subr.mxu0 0.0
        %514 = vmatpush1.msra.mxu0 %v483
        %515 = vmatprep.subr.mxu0 0.0
        %516 = vmatpush1.msra.mxu0 %v484
        %517 = vmatprep.subr.mxu0 0.0
        %518 = vmatpush1.msra.mxu0 0.0
        %519 = vmatprep.subr.mxu0 0.0
        %520 = vmatpush1.msra.mxu0 0.0
        %521 = vmatprep.subr.mxu0 0.0
        %522 = vmatpush1.msra.mxu0 0.0
        %523 = vmatprep.subr.mxu0 0.0
        %524 = vmatpush1.msra.mxu0 0.0
        %525 = vmatprep.subr.mxu0 0.0
        %526 = vmatpush1.msra.mxu0 0.0
        %527 = vmatprep.subr.mxu0 0.0
        %528 = vmatpush1.msra.mxu0 0.0
        %529 = vmatprep.subr.mxu0 0.0
        %530 = vmatpush1.msra.mxu0 0.0
        %531 = vmatprep.subr.mxu0 0.0
        %532 = vmatpush1.msra.mxu0 0.0
        %533 = vmatprep.subr.mxu0 0.0
        %534 = vmatpush1.msra.mxu0 0.0
        %535 = vmatprep.subr.mxu0 0.0
        %536 = vmatpush1.msra.mxu0 0.0
        %537 = vmatprep.subr.mxu0 0.0
        %538 = vmatpush1.msra.mxu0 0.0
        %539 = vmatprep.subr.mxu0 0.0
        %540 = vmatpush1.msra.mxu0 0.0
        %541 = vmatprep.subr.mxu0 0.0
        %542 = vmatpush1.msra.mxu0 0.0
        %543 = vmatprep.subr.mxu0 0.0
        %544 = vmatpush1.msra.mxu0 0.0
        %545 = vmatprep.subr.mxu0 0.0
        %546 = vmatpush1.msra.mxu0 0.0
        %547 = vmatprep.subr.mxu0 0.0
        %548 = vmatpush1.msra.mxu0 0.0
        %549 = vmatprep.mubr.f32.mxu0 0.0
        %550 = vmatmul.mubr.f32.gmra.mrb[0].mxu0 %v468
        %v551 = vpop.f32.mrb[0].mxu0
        %v552 = vadd.f32 0.0, %v551
        %v553 = vpop.f32.mrb[0].mxu0
        %554 = vdwg.mxu0
        %v555 = vstv %s459
        %v556 = vmul.f32 %v555, %v552
        %v557 = vsub.f32 %v468, %v556
        %v558 = vld [vmem:[%s431] sm:$0x1]
        %v559 = vmul.f32 %v555, %v558
        %v560 = vadd.f32 %v557, %v559
        %v561 = vlaneseq
        %v562 = vand.u32 %v561, 127
        %vm563 = vcmp.eq.s32.totalorder %v562, 0
        %vm564 = vcmp.eq.s32.totalorder %v562, 127
        %v565 = vld [vmem:[%s436] sm:$0xff]
        %v566 = vld [vmem:[%s436 + $0x8] sm:$0xff]
        %v567 = vld [vmem:[%s436 + $0x10] sm:$0xff]
        %v568 = vld [vmem:[%s436 + $0x18] sm:$0xff]
        %v569 = vld [vmem:[%s441] sm:$0xf]
        %v570 = vld [vmem:[%s441 + $0x4] sm:$0xf]
        %v571 = vld [vmem:[%s441 + $0x8] sm:$0xf]
        %v572 = vld [vmem:[%s441 + $0xc] sm:$0xf]
        %v573 = vld [vmem:[%s446] sm:$0xf]
        %v574 = vld [vmem:[%s446 + $0x4] sm:$0xf]
        %v575 = vld [vmem:[%s446 + $0x8] sm:$0xf]
        %v576 = vld [vmem:[%s446 + $0xc] sm:$0xf]
        %v577 = vld [vmem:[%s449] sm:$0x1]
        %578 = vrot.lane.b32.xlu0 %v560, 1
        %v579 = vpop.permute.xlu0 %578
        %v580 = vsel %vm563, 0.0, %v579
        %581 = vrot.lane.b32.xlu0 %v560, 127
        %v582 = vpop.permute.xlu0 %581
        %v583 = vsel %vm564, 0.0, %v582
        %585 = vset.pattern.permute.xlu0 0
        %586 = vperm.xlu0 %585, %v565
        %v587 = vpop.permute.xlu0 %586
        %590 = vset.pattern.permute.xlu0 0
        %591 = vperm.xlu0 %590, %v566
        %v592 = vpop.permute.xlu0 %591
        %595 = vset.pattern.permute.xlu0 0
        %596 = vperm.xlu0 %595, %v567
        %v597 = vpop.permute.xlu0 %596
        %600 = vset.pattern.permute.xlu0 0
        %601 = vperm.xlu0 %600, %v568
        %v602 = vpop.permute.xlu0 %601
        %v604 = vlaneseq
        %v605 = vshrl.u32 %v604, 7
        %v606 = vsub.s32 0, %v605
        %v607 = vrot.slane %v580, %v606
        %v608 = vmul.f32 %v587, %v607
        %v609 = vmul.f32 %v592, %v607
        %v610 = vmul.f32 %v597, %v607
        %v611 = vmul.f32 %v602, %v607
        %612 = vset.pattern.permute.xlu0 1
        %613 = vperm.xlu0 %612, %v565
        %v614 = vpop.permute.xlu0 %613
        %616 = vset.pattern.permute.xlu0 1
        %617 = vperm.xlu0 %616, %v566
        %v618 = vpop.permute.xlu0 %617
        %620 = vset.pattern.permute.xlu0 1
        %621 = vperm.xlu0 %620, %v567
        %v622 = vpop.permute.xlu0 %621
        %624 = vset.pattern.permute.xlu0 1
        %625 = vperm.xlu0 %624, %v568
        %v626 = vpop.permute.xlu0 %625
        %v629 = vlaneseq
        %v630 = vshrl.u32 %v629, 7
        %v631 = vsub.s32 0, %v630
        %v632 = vrot.slane %v560, %v631
        %v634 = vmul.f32 %v614, %v632
        %v635 = vmul.f32 %v618, %v632
        %v636 = vmul.f32 %v622, %v632
        %v637 = vmul.f32 %v626, %v632
        %v638 = vadd.f32 %v608, %v634
        %v639 = vadd.f32 %v609, %v635
        %v640 = vadd.f32 %v610, %v636
        %v641 = vadd.f32 %v611, %v637
        %642 = vset.pattern.permute.xlu0 2
        %643 = vperm.xlu0 %642, %v565
        %v644 = vpop.permute.xlu0 %643
        %646 = vset.pattern.permute.xlu0 2
        %647 = vperm.xlu0 %646, %v566
        %v648 = vpop.permute.xlu0 %647
        %650 = vset.pattern.permute.xlu0 2
        %651 = vperm.xlu0 %650, %v567
        %v652 = vpop.permute.xlu0 %651
        %654 = vset.pattern.permute.xlu0 2
        %655 = vperm.xlu0 %654, %v568
        %v656 = vpop.permute.xlu0 %655
        %v658 = vlaneseq
        %v659 = vshrl.u32 %v658, 7
        %v660 = vsub.s32 0, %v659
        %v661 = vrot.slane %v583, %v660
        %v662 = vmul.f32 %v644, %v661
        %v663 = vmul.f32 %v648, %v661
        %v664 = vmul.f32 %v652, %v661
        %v665 = vmul.f32 %v656, %v661
        %v666 = vadd.f32 %v638, %v662
        %v667 = vadd.f32 %v639, %v663
        %v668 = vadd.f32 %v640, %v664
        %v669 = vadd.f32 %v641, %v665
        %v670 = vmax.f32 %v666, 0.0
        %v671 = vmax.f32 %v667, 0.0
        %v672 = vmax.f32 %v668, 0.0
        %v673 = vmax.f32 %v669, 0.0
        %674 = vrot.lane.b32.xlu0 %v670, 1
        %v675 = vpop.permute.xlu0 %674
        %676 = vrot.lane.b32.xlu0 %v671, 1
        %v677 = vpop.permute.xlu0 %676
        %678 = vrot.lane.b32.xlu0 %v672, 1
        %v679 = vpop.permute.xlu0 %678
        %680 = vrot.lane.b32.xlu0 %v673, 1
        %v681 = vpop.permute.xlu0 %680
        %v682 = vsel %vm563, 0.0, %v675
        %v683 = vsel %vm563, 0.0, %v677
        %v684 = vsel %vm563, 0.0, %v679
        %v685 = vsel %vm563, 0.0, %v681
        %686 = vrot.lane.b32.xlu0 %v670, 127
        %v687 = vpop.permute.xlu0 %686
        %688 = vrot.lane.b32.xlu0 %v671, 127
        %v689 = vpop.permute.xlu0 %688
        %690 = vrot.lane.b32.xlu0 %v672, 127
        %v691 = vpop.permute.xlu0 %690
        %692 = vrot.lane.b32.xlu0 %v673, 127
        %v693 = vpop.permute.xlu0 %692
        %v694 = vsel %vm564, 0.0, %v687
        %v695 = vsel %vm564, 0.0, %v689
        %v696 = vsel %vm564, 0.0, %v691
        %v697 = vsel %vm564, 0.0, %v693
        %v698 = vpack.c.bf16 %v683, %v682
        %v699 = vpack.c.bf16 %v685, %v684
        %v700 = vpack.c.bf16 %v671, %v670
        %v701 = vpack.c.bf16 %v673, %v672
        %v702 = vpack.c.bf16 %v695, %v694
        %v703 = vpack.c.bf16 %v697, %v696
        %v708 = vunpack.c.l.b16 %v569
        %v709 = vunpack.c.l.b16 %v570
        %v710 = vunpack.c.l.b16 %v571
        %v711 = vunpack.c.l.b16 %v572
        %v712 = vpack.c.b16 %v709, %v708
        %v713 = vpack.c.b16 %v711, %v710
        %vm714 = vcmask 785408
        %v716 = vsel %vm714, %v712, 0
        %v719 = vsel %vm714, %v713, 0
        %721 = vmatprep.subr.bf16.mxu0 0
        %722 = vmatpush1.bf16.msra.mxu0 %v698
        %723 = vmatprep.subr.bf16.mxu0 0
        %724 = vmatpush1.bf16.msra.mxu0 %v699
        %725 = vmatprep.subr.bf16.mxu0 0
        %726 = vmatpush1.bf16.msra.mxu0 %v700
        %727 = vmatprep.subr.bf16.mxu0 0
        %728 = vmatpush1.bf16.msra.mxu0 %v701
        %729 = vmatprep.subr.bf16.mxu0 0
        %730 = vmatpush1.bf16.msra.mxu0 %v702
        %731 = vmatprep.subr.bf16.mxu0 0
        %732 = vmatpush1.bf16.msra.mxu0 %v703
        %733 = vmatprep.subr.bf16.mxu0 0
        %734 = vmatpush1.bf16.msra.mxu0 0
        %735 = vmatprep.subr.bf16.mxu0 0
        %736 = vmatpush1.bf16.msra.mxu0 0
        %737 = vmatprep.subr.bf16.mxu0 0
        %738 = vmatpush1.bf16.msra.mxu0 0
        %739 = vmatprep.subr.bf16.mxu0 0
        %740 = vmatpush1.bf16.msra.mxu0 0
        %741 = vmatprep.subr.bf16.mxu0 0
        %742 = vmatpush1.bf16.msra.mxu0 0
        %743 = vmatprep.subr.bf16.mxu0 0
        %744 = vmatpush1.bf16.msra.mxu0 0
        %745 = vmatprep.subr.bf16.mxu0 0
        %746 = vmatpush1.bf16.msra.mxu0 0
        %747 = vmatprep.subr.bf16.mxu0 0
        %748 = vmatpush1.bf16.msra.mxu0 0
        %749 = vmatprep.subr.bf16.mxu0 0
        %750 = vmatpush1.bf16.msra.mxu0 0
        %751 = vmatprep.subr.bf16.mxu0 0
        %752 = vmatpush1.bf16.msra.mxu0 0
        %753 = vmatprep.mubr.bf16.mxu0 0
        %754 = vmatmul.mubr.bf16.gmra.mrb[0].mxu0 %v716
        %v755 = vpop.f32.mrb[0].mxu0
        %v756 = vadd.f32 0.0, %v755
        %v757 = vpop.f32.mrb[0].mxu0
        %v758 = vpop.f32.mrb[0].mxu0
        %v759 = vadd.f32 0.0, %v758
        %v760 = vpop.f32.mrb[0].mxu0
        %761 = vmatprep.mubr.bf16.mxu0 0
        %762 = vmatmul.mubr.bf16.gmra.mrb[0].mxu0 %v719
        %v763 = vpop.f32.mrb[0].mxu0
        %v764 = vadd.f32 0.0, %v763
        %v765 = vpop.f32.mrb[0].mxu0
        %v766 = vpop.f32.mrb[0].mxu0
        %v767 = vadd.f32 0.0, %v766
        %v768 = vpop.f32.mrb[0].mxu0
        %769 = vdwg.mxu0
        %s770 = ssub.f32 0.0, %s461
        %v771 = vstv %s770
        %v772 = vmax.f32 %v771, %v756
        %v773 = vmax.f32 %v771, %v759
        %v774 = vmax.f32 %v771, %v764
        %v775 = vmax.f32 %v771, %v767
        %v776 = vstv %s461
        %v777 = vmin.f32 %v776, %v772
        %v778 = vmin.f32 %v776, %v773
        %v779 = vmin.f32 %v776, %v774
        %v780 = vmin.f32 %v776, %v775
        %v781 = vsub.f32 %v756, %v777
        %v782 = vsub.f32 %v759, %v778
        %v783 = vsub.f32 %v764, %v779
        %v784 = vsub.f32 %v767, %v780
        %785 = vrot.lane.b32.xlu0 %v781, 1
        %v786 = vpop.permute.xlu0 %785
        %787 = vrot.lane.b32.xlu0 %v782, 1
        %v788 = vpop.permute.xlu0 %787
        %789 = vrot.lane.b32.xlu0 %v783, 1
        %v790 = vpop.permute.xlu0 %789
        %791 = vrot.lane.b32.xlu0 %v784, 1
        %v792 = vpop.permute.xlu0 %791
        %v793 = vsel %vm563, 0.0, %v786
        %v794 = vsel %vm563, 0.0, %v788
        %v795 = vsel %vm563, 0.0, %v790
        %v796 = vsel %vm563, 0.0, %v792
        %797 = vrot.lane.b32.xlu0 %v781, 127
        %v798 = vpop.permute.xlu0 %797
        %799 = vrot.lane.b32.xlu0 %v782, 127
        %v800 = vpop.permute.xlu0 %799
        %801 = vrot.lane.b32.xlu0 %v783, 127
        %v802 = vpop.permute.xlu0 %801
        %803 = vrot.lane.b32.xlu0 %v784, 127
        %v804 = vpop.permute.xlu0 %803
        %v805 = vsel %vm564, 0.0, %v798
        %v806 = vsel %vm564, 0.0, %v800
        %v807 = vsel %vm564, 0.0, %v802
        %v808 = vsel %vm564, 0.0, %v804
        %v809 = vpack.c.bf16 %v794, %v793
        %v810 = vpack.c.bf16 %v796, %v795
        %v811 = vpack.c.bf16 %v782, %v781
        %v812 = vpack.c.bf16 %v784, %v783
        %v813 = vpack.c.bf16 %v806, %v805
        %v814 = vpack.c.bf16 %v808, %v807
        %v819 = vunpack.c.l.b16 %v573
        %v820 = vunpack.c.l.b16 %v574
        %v821 = vunpack.c.l.b16 %v575
        %v822 = vunpack.c.l.b16 %v576
        %v823 = vpack.c.b16 %v820, %v819
        %v824 = vpack.c.b16 %v822, %v821
        %v826 = vsel %vm714, %v823, 0
        %v829 = vsel %vm714, %v824, 0
        %831 = vmatprep.subr.bf16.mxu0 0
        %832 = vmatpush1.bf16.msra.mxu0 %v809
        %833 = vmatprep.subr.bf16.mxu0 0
        %834 = vmatpush1.bf16.msra.mxu0 %v810
        %835 = vmatprep.subr.bf16.mxu0 0
        %836 = vmatpush1.bf16.msra.mxu0 %v811
        %837 = vmatprep.subr.bf16.mxu0 0
        %838 = vmatpush1.bf16.msra.mxu0 %v812
        %839 = vmatprep.subr.bf16.mxu0 0
        %840 = vmatpush1.bf16.msra.mxu0 %v813
        %841 = vmatprep.subr.bf16.mxu0 0
        %842 = vmatpush1.bf16.msra.mxu0 %v814
        %843 = vmatprep.subr.bf16.mxu0 0
        %844 = vmatpush1.bf16.msra.mxu0 0
        %845 = vmatprep.subr.bf16.mxu0 0
        %846 = vmatpush1.bf16.msra.mxu0 0
        %847 = vmatprep.subr.bf16.mxu0 0
        %848 = vmatpush1.bf16.msra.mxu0 0
        %849 = vmatprep.subr.bf16.mxu0 0
        %850 = vmatpush1.bf16.msra.mxu0 0
        %851 = vmatprep.subr.bf16.mxu0 0
        %852 = vmatpush1.bf16.msra.mxu0 0
        %853 = vmatprep.subr.bf16.mxu0 0
        %854 = vmatpush1.bf16.msra.mxu0 0
        %855 = vmatprep.subr.bf16.mxu0 0
        %856 = vmatpush1.bf16.msra.mxu0 0
        %857 = vmatprep.subr.bf16.mxu0 0
        %858 = vmatpush1.bf16.msra.mxu0 0
        %859 = vmatprep.subr.bf16.mxu0 0
        %860 = vmatpush1.bf16.msra.mxu0 0
        %861 = vmatprep.subr.bf16.mxu0 0
        %862 = vmatpush1.bf16.msra.mxu0 0
        %863 = vmatprep.mubr.bf16.mxu0 0
        %864 = vmatmul.mubr.bf16.gmra.mrb[0].mxu0 %v826
        %v865 = vpop.f32.mrb[0].mxu0
        %v866 = vadd.f32 0.0, %v865
        %v867 = vpop.f32.mrb[0].mxu0
        %v868 = vpop.f32.mrb[0].mxu0
        %v869 = vadd.f32 0.0, %v868
        %v870 = vpop.f32.mrb[0].mxu0
        %871 = vmatprep.mubr.bf16.mxu0 0
        %872 = vmatmul.mubr.bf16.gmra.mrb[0].mxu0 %v829
        %v873 = vpop.f32.mrb[0].mxu0
        %v874 = vadd.f32 0.0, %v873
        %v875 = vpop.f32.mrb[0].mxu0
        %v876 = vpop.f32.mrb[0].mxu0
        %v877 = vadd.f32 0.0, %v876
        %v878 = vpop.f32.mrb[0].mxu0
        %879 = vdwg.mxu0
        %v880 = vmax.f32 %v866, 0.0
        %v881 = vmax.f32 %v869, 0.0
        %v882 = vmax.f32 %v874, 0.0
        %v883 = vmax.f32 %v877, 0.0
        %884 = vrot.lane.b32.xlu0 %v880, 1
        %v885 = vpop.permute.xlu0 %884
        %886 = vrot.lane.b32.xlu0 %v881, 1
        %v887 = vpop.permute.xlu0 %886
        %888 = vrot.lane.b32.xlu0 %v882, 1
        %v889 = vpop.permute.xlu0 %888
        %890 = vrot.lane.b32.xlu0 %v883, 1
        %v891 = vpop.permute.xlu0 %890
        %v892 = vsel %vm563, 0.0, %v885
        %v893 = vsel %vm563, 0.0, %v887
        %v894 = vsel %vm563, 0.0, %v889
        %v895 = vsel %vm563, 0.0, %v891
        %896 = vrot.lane.b32.xlu0 %v880, 127
        %v897 = vpop.permute.xlu0 %896
        %898 = vrot.lane.b32.xlu0 %v881, 127
        %v899 = vpop.permute.xlu0 %898
        %900 = vrot.lane.b32.xlu0 %v882, 127
        %v901 = vpop.permute.xlu0 %900
        %902 = vrot.lane.b32.xlu0 %v883, 127
        %v903 = vpop.permute.xlu0 %902
        %v904 = vsel %vm564, 0.0, %v897
        %v905 = vsel %vm564, 0.0, %v899
        %v906 = vsel %vm564, 0.0, %v901
        %v907 = vsel %vm564, 0.0, %v903
        %v908 = vpack.c.bf16 %v893, %v892
        %v909 = vpack.c.bf16 %v895, %v894
        %v910 = vpack.c.bf16 %v881, %v880
        %v911 = vpack.c.bf16 %v883, %v882
        %v912 = vpack.c.bf16 %v905, %v904
        %v913 = vpack.c.bf16 %v907, %v906
        %v915 = vsel %vm714, %v577, 0
        %917 = vmatprep.subr.bf16.mxu0 0
        %918 = vmatpush1.bf16.msra.mxu0 %v908
        %919 = vmatprep.subr.bf16.mxu0 0
        %920 = vmatpush1.bf16.msra.mxu0 %v909
        %921 = vmatprep.subr.bf16.mxu0 0
        %922 = vmatpush1.bf16.msra.mxu0 %v910
        %923 = vmatprep.subr.bf16.mxu0 0
        %924 = vmatpush1.bf16.msra.mxu0 %v911
        %925 = vmatprep.subr.bf16.mxu0 0
        %926 = vmatpush1.bf16.msra.mxu0 %v912
        %927 = vmatprep.subr.bf16.mxu0 0
        %928 = vmatpush1.bf16.msra.mxu0 %v913
        %929 = vmatprep.subr.bf16.mxu0 0
        %930 = vmatpush1.bf16.msra.mxu0 0
        %931 = vmatprep.subr.bf16.mxu0 0
        %932 = vmatpush1.bf16.msra.mxu0 0
        %933 = vmatprep.subr.bf16.mxu0 0
        %934 = vmatpush1.bf16.msra.mxu0 0
        %935 = vmatprep.subr.bf16.mxu0 0
        %936 = vmatpush1.bf16.msra.mxu0 0
        %937 = vmatprep.subr.bf16.mxu0 0
        %938 = vmatpush1.bf16.msra.mxu0 0
        %939 = vmatprep.subr.bf16.mxu0 0
        %940 = vmatpush1.bf16.msra.mxu0 0
        %941 = vmatprep.subr.bf16.mxu0 0
        %942 = vmatpush1.bf16.msra.mxu0 0
        %943 = vmatprep.subr.bf16.mxu0 0
        %944 = vmatpush1.bf16.msra.mxu0 0
        %945 = vmatprep.subr.bf16.mxu0 0
        %946 = vmatpush1.bf16.msra.mxu0 0
        %947 = vmatprep.subr.bf16.mxu0 0
        %948 = vmatpush1.bf16.msra.mxu0 0
        %949 = vmatprep.mubr.bf16.mxu0 0
        %950 = vmatmul.mubr.bf16.gmra.mrb[0].mxu0 %v915
        %v951 = vpop.f32.mrb[0].mxu0
        %v952 = vadd.f32 0.0, %v951
        %v953 = vpop.f32.mrb[0].mxu0
        %v954 = vpop.f32.mrb[0].mxu0
        %v955 = vpop.f32.mrb[0].mxu0
        %956 = vdwg.mxu0
        %957 = vrot.lane.b32.xlu0 %v756, 1
        %v958 = vpop.permute.xlu0 %957
        %959 = vrot.lane.b32.xlu0 %v759, 1
        %v960 = vpop.permute.xlu0 %959
        %961 = vrot.lane.b32.xlu0 %v764, 1
        %v962 = vpop.permute.xlu0 %961
        %963 = vrot.lane.b32.xlu0 %v767, 1
        %v964 = vpop.permute.xlu0 %963
        %v965 = vsel %vm563, 0.0, %v958
        %v966 = vsel %vm563, 0.0, %v960
        %v967 = vsel %vm563, 0.0, %v962
        %v968 = vsel %vm563, 0.0, %v964
        %969 = vrot.lane.b32.xlu0 %v756, 127
        %v970 = vpop.permute.xlu0 %969
        %971 = vrot.lane.b32.xlu0 %v759, 127
        %v972 = vpop.permute.xlu0 %971
        %973 = vrot.lane.b32.xlu0 %v764, 127
        %v974 = vpop.permute.xlu0 %973
        %975 = vrot.lane.b32.xlu0 %v767, 127
        %v976 = vpop.permute.xlu0 %975
        %v977 = vsel %vm564, 0.0, %v970
        %v978 = vsel %vm564, 0.0, %v972
        %v979 = vsel %vm564, 0.0, %v974
        %v980 = vsel %vm564, 0.0, %v976
        %v981 = vpack.c.bf16 %v966, %v965
        %v982 = vpack.c.bf16 %v968, %v967
        %v983 = vpack.c.bf16 %v759, %v756
        %v984 = vpack.c.bf16 %v767, %v764
        %v985 = vpack.c.bf16 %v978, %v977
        %v986 = vpack.c.bf16 %v980, %v979
        %987 = vmatprep.subr.bf16.mxu0 0
        %988 = vmatpush1.bf16.msra.mxu0 %v981
        %989 = vmatprep.subr.bf16.mxu0 0
        %990 = vmatpush1.bf16.msra.mxu0 %v982
        %991 = vmatprep.subr.bf16.mxu0 0
        %992 = vmatpush1.bf16.msra.mxu0 %v983
        %993 = vmatprep.subr.bf16.mxu0 0
        %994 = vmatpush1.bf16.msra.mxu0 %v984
        %995 = vmatprep.subr.bf16.mxu0 0
        %996 = vmatpush1.bf16.msra.mxu0 %v985
        %997 = vmatprep.subr.bf16.mxu0 0
        %998 = vmatpush1.bf16.msra.mxu0 %v986
        %999 = vmatprep.subr.bf16.mxu0 0
        %1000 = vmatpush1.bf16.msra.mxu0 0
        %1001 = vmatprep.subr.bf16.mxu0 0
        %1002 = vmatpush1.bf16.msra.mxu0 0
        %1003 = vmatprep.subr.bf16.mxu0 0
        %1004 = vmatpush1.bf16.msra.mxu0 0
        %1005 = vmatprep.subr.bf16.mxu0 0
        %1006 = vmatpush1.bf16.msra.mxu0 0
        %1007 = vmatprep.subr.bf16.mxu0 0
        %1008 = vmatpush1.bf16.msra.mxu0 0
        %1009 = vmatprep.subr.bf16.mxu0 0
        %1010 = vmatpush1.bf16.msra.mxu0 0
        %1011 = vmatprep.subr.bf16.mxu0 0
        %1012 = vmatpush1.bf16.msra.mxu0 0
        %1013 = vmatprep.subr.bf16.mxu0 0
        %1014 = vmatpush1.bf16.msra.mxu0 0
        %1015 = vmatprep.subr.bf16.mxu0 0
        %1016 = vmatpush1.bf16.msra.mxu0 0
        %1017 = vmatprep.subr.bf16.mxu0 0
        %1018 = vmatpush1.bf16.msra.mxu0 0
        %1019 = vmatprep.mubr.bf16.mxu0 0
        %1020 = vmatmul.mubr.bf16.gmra.mrb[0].mxu0 %v826
        %v1021 = vpop.f32.mrb[0].mxu0
        %v1022 = vadd.f32 0.0, %v1021
        %v1023 = vpop.f32.mrb[0].mxu0
        %v1024 = vpop.f32.mrb[0].mxu0
        %v1025 = vadd.f32 0.0, %v1024
        %v1026 = vpop.f32.mrb[0].mxu0
        %1027 = vmatprep.mubr.bf16.mxu0 0
        %1028 = vmatmul.mubr.bf16.gmra.mrb[0].mxu0 %v829
        %v1029 = vpop.f32.mrb[0].mxu0
        %v1030 = vadd.f32 0.0, %v1029
        %v1031 = vpop.f32.mrb[0].mxu0
        %v1032 = vpop.f32.mrb[0].mxu0
        %v1033 = vadd.f32 0.0, %v1032
        %v1034 = vpop.f32.mrb[0].mxu0
        %1035 = vdwg.mxu0
        %v1036 = vmax.f32 %v1022, 0.0
        %v1037 = vmax.f32 %v1025, 0.0
        %v1038 = vmax.f32 %v1030, 0.0
        %v1039 = vmax.f32 %v1033, 0.0
        %1040 = vrot.lane.b32.xlu0 %v1036, 1
        %v1041 = vpop.permute.xlu0 %1040
        %1042 = vrot.lane.b32.xlu0 %v1037, 1
        %v1043 = vpop.permute.xlu0 %1042
        %1044 = vrot.lane.b32.xlu0 %v1038, 1
        %v1045 = vpop.permute.xlu0 %1044
        %1046 = vrot.lane.b32.xlu0 %v1039, 1
        %v1047 = vpop.permute.xlu0 %1046
        %v1048 = vsel %vm563, 0.0, %v1041
        %v1049 = vsel %vm563, 0.0, %v1043
        %v1050 = vsel %vm563, 0.0, %v1045
        %v1051 = vsel %vm563, 0.0, %v1047
        %1052 = vrot.lane.b32.xlu0 %v1036, 127
        %v1053 = vpop.permute.xlu0 %1052
        %1054 = vrot.lane.b32.xlu0 %v1037, 127
        %v1055 = vpop.permute.xlu0 %1054
        %1056 = vrot.lane.b32.xlu0 %v1038, 127
        %v1057 = vpop.permute.xlu0 %1056
        %1058 = vrot.lane.b32.xlu0 %v1039, 127
        %v1059 = vpop.permute.xlu0 %1058
        %v1060 = vsel %vm564, 0.0, %v1053
        %v1061 = vsel %vm564, 0.0, %v1055
        %v1062 = vsel %vm564, 0.0, %v1057
        %v1063 = vsel %vm564, 0.0, %v1059
        %v1064 = vpack.c.bf16 %v1049, %v1048
        %v1065 = vpack.c.bf16 %v1051, %v1050
        %v1066 = vpack.c.bf16 %v1037, %v1036
        %v1067 = vpack.c.bf16 %v1039, %v1038
        %v1068 = vpack.c.bf16 %v1061, %v1060
        %v1069 = vpack.c.bf16 %v1063, %v1062
        %1070 = vmatprep.subr.bf16.mxu0 0
        %1071 = vmatpush1.bf16.msra.mxu0 %v1064
        %1072 = vmatprep.subr.bf16.mxu0 0
        %1073 = vmatpush1.bf16.msra.mxu0 %v1065
        %1074 = vmatprep.subr.bf16.mxu0 0
        %1075 = vmatpush1.bf16.msra.mxu0 %v1066
        %1076 = vmatprep.subr.bf16.mxu0 0
        %1077 = vmatpush1.bf16.msra.mxu0 %v1067
        %1078 = vmatprep.subr.bf16.mxu0 0
        %1079 = vmatpush1.bf16.msra.mxu0 %v1068
        %1080 = vmatprep.subr.bf16.mxu0 0
        %1081 = vmatpush1.bf16.msra.mxu0 %v1069
        %1082 = vmatprep.subr.bf16.mxu0 0
        %1083 = vmatpush1.bf16.msra.mxu0 0
        %1084 = vmatprep.subr.bf16.mxu0 0
        %1085 = vmatpush1.bf16.msra.mxu0 0
        %1086 = vmatprep.subr.bf16.mxu0 0
        %1087 = vmatpush1.bf16.msra.mxu0 0
        %1088 = vmatprep.subr.bf16.mxu0 0
        %1089 = vmatpush1.bf16.msra.mxu0 0
        %1090 = vmatprep.subr.bf16.mxu0 0
        %1091 = vmatpush1.bf16.msra.mxu0 0
        %1092 = vmatprep.subr.bf16.mxu0 0
        %1093 = vmatpush1.bf16.msra.mxu0 0
        %1094 = vmatprep.subr.bf16.mxu0 0
        %1095 = vmatpush1.bf16.msra.mxu0 0
        %1096 = vmatprep.subr.bf16.mxu0 0
        %1097 = vmatpush1.bf16.msra.mxu0 0
        %1098 = vmatprep.subr.bf16.mxu0 0
        %1099 = vmatpush1.bf16.msra.mxu0 0
        %1100 = vmatprep.subr.bf16.mxu0 0
        %1101 = vmatpush1.bf16.msra.mxu0 0
        %1102 = vmatprep.mubr.bf16.mxu0 0
        %1103 = vmatmul.mubr.bf16.gmra.mrb[0].mxu0 %v915
        %v1104 = vpop.f32.mrb[0].mxu0
        %v1105 = vadd.f32 0.0, %v1104
        %v1106 = vpop.f32.mrb[0].mxu0
        %v1107 = vpop.f32.mrb[0].mxu0
        %v1108 = vpop.f32.mrb[0].mxu0
        %1109 = vdwg.mxu0
        %1110 = vst [vmem:[%s416] sm:$0x1] %v952
        %v1111 = vsub.f32 %v1105, %v560
        %1112 = vst [vmem:[%s456] sm:$0x1] %v1111
        %s1113 = sand.u32 %s243, 1
        %s1114 = scalar_lea.sflag [#allocation3], %s1113
        %s1115 = sand.u32 %s243, 1
        %s1116 = scalar_lea.vmem [#allocation5], %s1115
        %p1117 = scmp.lt.s32.totalorder %s30, 2
        %s1118 = scalar_select %p1117, %s30, 2
        %p1119 = scmp.lt.s32.totalorder %s29, 1
        %s1120 = scalar_select %p1119, %s29, 1
        %s1121 = smul.addr %s1118, 2
        %s1122 = sadd.s32 %s1120, %s1121
        %s1123 = scalar_lea.vmem %s9, %s1122
        // Predicated region
        $region61: #{ista_net1d_forward.1} parent=51 // pred_check
          %p1124 = pneg %p253
        $region62: #{ista_net1d_forward.1} parent=51 // pred_check_branch
          %1126 = sbr.rel (%p1124) target = $region64
        $region63: #{ista_net1d_forward.1} parent=51 // pred_region
          %s1128 = ssub.s32 16, 16
          %1129 = vsyncadd %s1114, %s1128
          %s1130 = smul.addr %s29, 16
          %s1131 = scalar_lea.hbm %s8, %s1130
          %s1133 = sshll.u32 %s1116, 4
          %s1134 = int_to_ptr.vmem [resolvable:$true] %s1133
          %1136 = dma.vmem_to_hbm [thread:$0]  %s1134, 16, %s1131, %s1114
        $region64: #{ista_net1d_forward.1} parent=51 // pred_fallthru
          _
        // Predicated region
        $region65: #{ista_net1d_forward.1} parent=51 // pred_check
          %p1137 = pneg %p281
        $region66: #{ista_net1d_forward.1} parent=51 // pred_check_branch
          %1139 = sbr.rel (%p1137) target = $region68
        $region67: #{ista_net1d_forward.1} parent=51 // pred_region
          _
        $region68: #{ista_net1d_forward.1} parent=51 // pred_fallthru
          _
      $region52: #{ista_net1d_forward.1} parent=5 // pred_fallthru
        _
      %p1140 = scmp.le.s32.totalorder 2, %s20
      // Predicated region
      $region69: #{ista_net1d_forward.1} parent=5 // pred_check
        %p1141 = pneg %p1140
      $region70: #{ista_net1d_forward.1} parent=5 // pred_check_branch
        %1143 = sbr.rel (%p1141) target = $region72
      $region71: #{ista_net1d_forward.1} parent=5 // pred_region
        %s1144 = ssub.s32 %s20, 2
        // Predicated region
        $region73: #{ista_net1d_forward.1} parent=71 // pred_check
          %p1145 = pneg %p259
        $region74: #{ista_net1d_forward.1} parent=71 // pred_check_branch
          %1147 = sbr.rel (%p1145) target = $region76
        $region75: #{ista_net1d_forward.1} parent=71 // pred_region
          %s1148 = sand.u32 %s244, 1
          %s1149 = scalar_lea.sflag [#allocation3], %s1148
          %s1150 = sand.u32 %s244, 1
          %s1151 = scalar_lea.vmem [#allocation5], %s1150
          %1152 = dma.done %s1149, 16
        $region76: #{ista_net1d_forward.1} parent=71 // pred_fallthru
          _
        // Predicated region
        $region77: #{ista_net1d_forward.1} parent=71 // pred_check
          %p1153 = pneg %p287
        $region78: #{ista_net1d_forward.1} parent=71 // pred_check_branch
          %1155 = sbr.rel (%p1153) target = $region80
        $region79: #{ista_net1d_forward.1} parent=71 // pred_region
          %p1156 = scmp.lt.s32.totalorder %s32, 2
          %s1157 = scalar_select %p1156, %s32, 2
          %p1158 = scmp.lt.s32.totalorder %s31, 1
          %s1159 = scalar_select %p1158, %s31, 1
          %s1160 = smul.addr %s1157, 2
          %s1161 = sadd.s32 %s1159, %s1160
          %s1162 = scalar_lea.vmem %s9, %s1161
        $region80: #{ista_net1d_forward.1} parent=71 // pred_fallthru
          _
      $region72: #{ista_net1d_forward.1} parent=5 // pred_fallthru
        _
    $region6: #{ista_net1d_forward.1} parent=1 // loop_footer
      %s24 = sadd.s32 1, %s20
    $region7: #{ista_net1d_forward.1} parent=1 // loop_footer_branch
      %19 = sbr.rel target = $region3
    $region8: #{ista_net1d_forward.1} parent=1 // loop_exit
      _
    %1163 = vsyncpa [#allocation3], 1
    %s1164 = scalar_lea.sflag [#allocation3], 1
    %1165 = vsyncpa %s1164, 1
    %1166 = vsyncpa [#allocation4], 1
    %s1167 = scalar_lea.sflag [#allocation4], 1
    %1168 = vsyncpa %s1167, 1

</llo_original>
